<compile_context>
chip_gen: v6e
topology: v6e:2x2x1
jax: 0.10.0
libtpu: 0.0.40
codegen_flags: <defaults>
</compile_context>

<pallas_src>
import functools

import jax
import jax.numpy as jnp
from jax.experimental import pallas as pl
from jax.experimental.pallas import tpu as pltpu

NEG_BIG = -1e30


def gat_layer_kernel(x_ref, w_ref, asrc_ref, adst_ref, bias_ref, maskb_ref,
                     out_ref, *, heads, out_ch, tile_m, valid_ch,
                     apply_elu, apply_log_softmax):
    """One GATConv layer for one tile of destination-node rows.

    x_ref:     [N, Fin]       full node features (resident, source side)
    w_ref:     [Fin, H*C]     fused projection for all heads
    asrc_ref:  [H*C, H]       block-diagonal source attention matrix
    adst_ref:  [H*C, H]       block-diagonal target attention matrix
    bias_ref:  [1, H*C]       output bias
    maskb_ref: [TM, N]        additive adjacency bias (0 edge / -1e30 non-edge)
    out_ref:   [TM, H*C]      this tile's concatenated head outputs
    """
    n_nodes = x_ref.shape[0]
    hc = heads * out_ch

    x_all = x_ref[...]
    w = w_ref[...]
    # One fused projection for ALL heads (64/128 output lanes on the MXU
    # instead of eight 8-lane per-head matmuls).
    xp_src = jnp.dot(x_all, w, preferred_element_type=jnp.float32)           # [N, HC]

    # Per-head source logits via a block-diagonal matmul (MXU), then a single
    # sublane->lane transpose hoisted out of the head loop (XLU, once).
    s_src = jnp.dot(xp_src, asrc_ref[...], preferred_element_type=jnp.float32)  # [N, H]
    s_srcT = jnp.transpose(s_src)                                                # [H, N]

    # Destination-side logits only for this tile's rows.
    if tile_m == n_nodes:
        xp_dst = xp_src
    else:
        i = pl.program_id(0)
        row0 = pl.multiple_of(i * tile_m, tile_m)
        x_dst = x_ref[pl.ds(row0, tile_m), :]
        xp_dst = jnp.dot(x_dst, w, preferred_element_type=jnp.float32)       # [TM, HC]
    s_dst = jnp.dot(xp_dst, adst_ref[...], preferred_element_type=jnp.float32)  # [TM, H]

    mask_bias = maskb_ref[...]                                               # [TM, N]

    head_outs = []
    for h in range(heads):  # static unroll; each head's [TM,N] alpha dies here
        s_dst_h = s_dst[:, h:h + 1]                                          # [TM, 1]
        e = s_dst_h + s_srcT[h:h + 1, :]                                     # [TM, N]
        e = jnp.where(e > 0, e, 0.2 * e)           # LeakyReLU(0.2)
        e = e + mask_bias                           # additive mask (no select)
        e_max = jnp.max(e, axis=-1, keepdims=True)
        p = jnp.exp(e - e_max)
        denom = jnp.sum(p, axis=-1, keepdims=True)
        alpha = p * pl.reciprocal(denom, approx=True)                        # EUP vrcp
        xp_h = xp_src[:, h * out_ch:(h + 1) * out_ch]                        # [N, C]
        head_outs.append(
            jnp.dot(alpha, xp_h, preferred_element_type=jnp.float32))        # [TM, C]

    # Write the output as one contiguous slab (single lane-dense store).
    y = head_outs[0] if heads == 1 else jnp.concatenate(head_outs, axis=-1)
    y = y + bias_ref[...]

    if apply_elu:
        y = jnp.where(y > 0, y, jnp.exp(y) - 1.0)

    if apply_log_softmax:
        if valid_ch < hc:
            # Padded channels must not contribute to the row-wise softmax.
            col = jax.lax.broadcasted_iota(jnp.int32, y.shape, 1)
            y = jnp.where(col < valid_ch, y, jnp.float32(NEG_BIG))
        m = jnp.max(y, axis=-1, keepdims=True)
        lse = m + jnp.log(jnp.sum(jnp.exp(y - m), axis=-1, keepdims=True))
        y = y - lse

    out_ref[...] = y.astype(out_ref.dtype)


def _pick_tile(n, max_tile=256):
    """Row-tile size for the destination-node grid axis."""
    if n <= max_tile:
        return n
    for t in (max_tile, 128, 64, 32, 16, 8):
        if n % t == 0:
            return t
    return n


def gat_layer(x, w, a_src_bd, a_dst_bd, bias, mask_bias, *, heads, out_ch,
              valid_ch, apply_elu, apply_log_softmax):
    n, fin = x.shape
    hc = heads * out_ch
    tile_m = _pick_tile(n)
    grid = (n // tile_m,)

    kernel = functools.partial(
        gat_layer_kernel, heads=heads, out_ch=out_ch, tile_m=tile_m,
        valid_ch=valid_ch, apply_elu=apply_elu,
        apply_log_softmax=apply_log_softmax)

    return pl.pallas_call(
        kernel,
        out_shape=jax.ShapeDtypeStruct((n, hc), jnp.float32),
        grid=grid,
        in_specs=[
            pl.BlockSpec((n, fin), lambda i: (0, 0)),      # x     (resident)
            pl.BlockSpec((fin, hc), lambda i: (0, 0)),     # W     (resident)
            pl.BlockSpec((hc, heads), lambda i: (0, 0)),   # A_src (resident)
            pl.BlockSpec((hc, heads), lambda i: (0, 0)),   # A_dst (resident)
            pl.BlockSpec((1, hc), lambda i: (0, 0)),       # bias  (resident)
            pl.BlockSpec((tile_m, n), lambda i: (i, 0)),   # mask bias row tile
        ],
        out_specs=pl.BlockSpec((tile_m, hc), lambda i: (i, 0)),
        compiler_params=pltpu.CompilerParams(
            dimension_semantics=("parallel",),
            vmem_limit_bytes=64 * 1024 * 1024),
    )(x, w, a_src_bd, a_dst_bd, bias, mask_bias)


def build_mask_bias(edge_index, n):
    """Additive attention bias: 0 for edges (incl. self-loops), -1e30 otherwise."""
    src = edge_index[0]
    dst = edge_index[1]
    adj = jnp.zeros((n, n), jnp.float32).at[dst, src].set(1.0)
    adj = jnp.maximum(adj, jnp.eye(n, dtype=jnp.float32))   # add_self_loops=True
    return jnp.where(adj > 0, 0.0, NEG_BIG).astype(jnp.float32)


def block_diag_attn(a):
    """a: [H, C] -> block-diagonal [H*C, H] with A[h*C + c, h] = a[h, c]."""
    h, c = a.shape
    eye = jnp.eye(h, dtype=a.dtype)
    return (a[:, :, None] * eye[:, None, :]).reshape(h * c, h)


def init_params(key, num_features, num_classes, hidden=8, heads1=8):
    ks = jax.random.split(key, 8)
    scale = 0.1
    return {
        # layer 1: GATConv(num_features, 8, heads=8, concat=True)
        "w1": scale * jax.random.normal(ks[0], (num_features, heads1 * hidden), jnp.float32),
        "a_src1": scale * jax.random.normal(ks[1], (heads1, hidden), jnp.float32),
        "a_dst1": scale * jax.random.normal(ks[2], (heads1, hidden), jnp.float32),
        "b1": scale * jax.random.normal(ks[3], (1, heads1 * hidden), jnp.float32),
        # layer 2: GATConv(8*8, num_classes, heads=1, concat=True)
        "w2": scale * jax.random.normal(ks[4], (heads1 * hidden, num_classes), jnp.float32),
        "a_src2": scale * jax.random.normal(ks[5], (1, num_classes), jnp.float32),
        "a_dst2": scale * jax.random.normal(ks[6], (1, num_classes), jnp.float32),
        "b2": scale * jax.random.normal(ks[7], (1, num_classes), jnp.float32),
    }


def prepare_params(p, *, num_classes, hidden=8, heads1=8, c2_pad=128):
    """Build the kernel-facing parameter set: fused/padded/block-diagonal."""
    c2_pad = max(c2_pad, num_classes)
    w2p = jnp.zeros((heads1 * hidden, c2_pad), jnp.float32).at[:, :num_classes].set(p["w2"])
    a_src2p = jnp.zeros((1, c2_pad), jnp.float32).at[:, :num_classes].set(p["a_src2"])
    a_dst2p = jnp.zeros((1, c2_pad), jnp.float32).at[:, :num_classes].set(p["a_dst2"])
    b2p = jnp.zeros((1, c2_pad), jnp.float32).at[:, :num_classes].set(p["b2"])
    return {
        "w1": p["w1"],
        "A_src1": block_diag_attn(p["a_src1"]),   # [64, 8]
        "A_dst1": block_diag_attn(p["a_dst1"]),
        "b1": p["b1"],
        "w2p": w2p,                                # [64, 128] zero-padded
        "A_src2": block_diag_attn(a_src2p),        # [128, 1]
        "A_dst2": block_diag_attn(a_dst2p),
        "b2p": b2p,
    }


@functools.partial(jax.jit, static_argnames=("num_classes", "hidden", "heads1"))
def net_forward(x, mask_bias, params, *, num_classes, hidden=8, heads1=8):
    # dropout(p=0.6) -> identity in eval mode
    h = gat_layer(x, params["w1"], params["A_src1"], params["A_dst1"],
                  params["b1"], mask_bias,
                  heads=heads1, out_ch=hidden, valid_ch=heads1 * hidden,
                  apply_elu=True, apply_log_softmax=False)          # [N, 64], ELU fused
    # dropout(p=0.6) -> identity in eval mode
    c2_pad = params["w2p"].shape[1]
    out_pad = gat_layer(h, params["w2p"], params["A_src2"], params["A_dst2"],
                        params["b2p"], mask_bias,
                        heads=1, out_ch=c2_pad, valid_ch=num_classes,
                        apply_elu=False, apply_log_softmax=True)    # [N, 128] lane-dense
    return out_pad[:, :num_classes]                                 # slice padding off


if __name__ == "__main__":
    NUM_NODES = 8
    NUM_FEATURES = 16
    NUM_CLASSES = 4

    key = jax.random.PRNGKey(0)
    k_x, k_p = jax.random.split(key)

    x = jax.random.normal(k_x, (NUM_NODES, NUM_FEATURES), jnp.float32)

    # Small deterministic graph: bidirectional ring over 8 nodes.
    src = jnp.arange(NUM_NODES, dtype=jnp.int32)
    dst = (src + 1) % NUM_NODES
    edge_index = jnp.stack([jnp.concatenate([src, dst]),
                            jnp.concatenate([dst, src])], axis=0)    # [2, 16]

    mask_bias = build_mask_bias(edge_index, NUM_NODES)               # [N, N]
    raw_params = init_params(k_p, NUM_FEATURES, NUM_CLASSES)
    params = prepare_params(raw_params, num_classes=NUM_CLASSES,
                            hidden=8, heads1=8, c2_pad=128)

    out = net_forward(x, mask_bias, params, num_classes=NUM_CLASSES)
    jax.block_until_ready(out)

    assert out.shape == (NUM_NODES, NUM_CLASSES)
    # log_softmax rows should sum to ~1 after exp
    assert bool(jnp.all(jnp.abs(jnp.sum(jnp.exp(out), axis=1) - 1.0) < 1e-4))
    print("KERNEL_OK")
</pallas_src>

<mosaic_0001>
module attributes {stable_mosaic.version = 11 : i64} {
  func.func @gat_layer_kernel(%arg0: i32, %arg1: memref<8x16xf32, #tpu.memory_space<vmem>>, %arg2: memref<16x64xf32, #tpu.memory_space<vmem>>, %arg3: memref<64x8xf32, #tpu.memory_space<vmem>>, %arg4: memref<64x8xf32, #tpu.memory_space<vmem>>, %arg5: memref<1x64xf32, #tpu.memory_space<vmem>>, %arg6: memref<8x8xf32, #tpu.memory_space<vmem>>, %arg7: memref<8x64xf32, #tpu.memory_space<vmem>>) attributes {dimension_semantics = [#tpu.dimension_semantics<parallel>], iteration_bounds = array<i64: 1>, scalar_prefetch = 0 : i64, scratch_operands = 0 : i64, tpu.core_type = #tpu.core_type<tc>, window_params = [{pipeline_mode = #tpu.pipeline_mode<synchronous>, transform_indices = @transform_0, window_bounds = array<i64: 8, 16>}, {pipeline_mode = #tpu.pipeline_mode<synchronous>, transform_indices = @transform_1, window_bounds = array<i64: 16, 64>}, {pipeline_mode = #tpu.pipeline_mode<synchronous>, transform_indices = @transform_2, window_bounds = array<i64: 64, 8>}, {pipeline_mode = #tpu.pipeline_mode<synchronous>, transform_indices = @transform_3, window_bounds = array<i64: 64, 8>}, {pipeline_mode = #tpu.pipeline_mode<synchronous>, transform_indices = @transform_4, window_bounds = array<i64: 1, 64>}, {transform_indices = @transform_5, window_bounds = array<i64: 8, 8>}, {transform_indices = @transform_6, window_bounds = array<i64: 8, 64>}]} {
    %c0 = arith.constant 0 : index
    %c0_0 = arith.constant 0 : index
    %0 = vector.load %arg1[%c0, %c0_0] : memref<8x16xf32, #tpu.memory_space<vmem>>, vector<8x16xf32>
    %c0_1 = arith.constant 0 : index
    %c0_2 = arith.constant 0 : index
    %1 = vector.load %arg2[%c0_1, %c0_2] : memref<16x64xf32, #tpu.memory_space<vmem>>, vector<16x64xf32>
    %cst = arith.constant dense<0.000000e+00> : vector<8x64xf32>
    %2 = tpu.matmul %0, %1, %cst {dimension_numbers = #tpu.dot_dimension_numbers<[1], [0], [0], [1], [0, 0, 1, 1], [], []>} : vector<8x16xf32>, vector<16x64xf32>, vector<8x64xf32> -> vector<8x64xf32>
    %c0_3 = arith.constant 0 : index
    %c0_4 = arith.constant 0 : index
    %3 = vector.load %arg3[%c0_3, %c0_4] : memref<64x8xf32, #tpu.memory_space<vmem>>, vector<64x8xf32>
    %cst_5 = arith.constant dense<0.000000e+00> : vector<8x8xf32>
    %4 = tpu.matmul %2, %3, %cst_5 {dimension_numbers = #tpu.dot_dimension_numbers<[1], [0], [0], [1], [0, 0, 1, 1], [], []>} : vector<8x64xf32>, vector<64x8xf32>, vector<8x8xf32> -> vector<8x8xf32>
    %5 = tpu.transpose %4, [1, 0] : vector<8x8xf32> -> vector<8x8xf32>
    %c0_6 = arith.constant 0 : index
    %c0_7 = arith.constant 0 : index
    %6 = vector.load %arg4[%c0_6, %c0_7] : memref<64x8xf32, #tpu.memory_space<vmem>>, vector<64x8xf32>
    %cst_8 = arith.constant dense<0.000000e+00> : vector<8x8xf32>
    %7 = tpu.matmul %2, %6, %cst_8 {dimension_numbers = #tpu.dot_dimension_numbers<[1], [0], [0], [1], [0, 0, 1, 1], [], []>} : vector<8x64xf32>, vector<64x8xf32>, vector<8x8xf32> -> vector<8x8xf32>
    %c0_9 = arith.constant 0 : index
    %c0_10 = arith.constant 0 : index
    %8 = vector.load %arg6[%c0_9, %c0_10] : memref<8x8xf32, #tpu.memory_space<vmem>>, vector<8x8xf32>
    %9 = vector.extract_strided_slice %7 {offsets = [0, 0], sizes = [8, 1], strides = [1, 1]} : vector<8x8xf32> to vector<8x1xf32>
    %10 = vector.extract_strided_slice %5 {offsets = [0, 0], sizes = [1, 8], strides = [1, 1]} : vector<8x8xf32> to vector<1x8xf32>
    %11 = vector.broadcast %9 : vector<8x1xf32> to vector<8x8xf32>
    %12 = vector.broadcast %10 : vector<1x8xf32> to vector<8x8xf32>
    %13 = arith.addf %11, %12 : vector<8x8xf32>
    %cst_11 = arith.constant 0.000000e+00 : f32
    %14 = vector.broadcast %cst_11 : f32 to vector<8x8xf32>
    %15 = arith.cmpf ogt, %13, %14 : vector<8x8xf32>
    %cst_12 = arith.constant 2.000000e-01 : f32
    %16 = vector.broadcast %cst_12 : f32 to vector<8x8xf32>
    %17 = arith.mulf %16, %13 : vector<8x8xf32>
    %18 = arith.select %15, %13, %17 : vector<8x8xi1>, vector<8x8xf32>
    %19 = arith.addf %18, %8 : vector<8x8xf32>
    %cst_13 = arith.constant dense<0xFF800000> : vector<8xf32>
    %20 = vector.multi_reduction <maximumf>, %19, %cst_13 [1] : vector<8x8xf32> to vector<8xf32>
    %21 = vector.shape_cast %20 : vector<8xf32> to vector<8x1xf32>
    %22 = vector.broadcast %21 : vector<8x1xf32> to vector<8x8xf32>
    %23 = arith.subf %19, %22 : vector<8x8xf32>
    %24 = math.exp %23 : vector<8x8xf32>
    %cst_14 = arith.constant dense<0.000000e+00> : vector<8xf32>
    %25 = vector.multi_reduction <add>, %24, %cst_14 [1] : vector<8x8xf32> to vector<8xf32>
    %26 = vector.shape_cast %25 : vector<8xf32> to vector<8x1xf32>
    %27 = tpu.reciprocal %26 {approx = true} : vector<8x1xf32> -> vector<8x1xf32>
    %28 = vector.broadcast %27 : vector<8x1xf32> to vector<8x8xf32>
    %29 = arith.mulf %24, %28 : vector<8x8xf32>
    %30 = vector.extract_strided_slice %2 {offsets = [0, 0], sizes = [8, 8], strides = [1, 1]} : vector<8x64xf32> to vector<8x8xf32>
    %cst_15 = arith.constant dense<0.000000e+00> : vector<8x8xf32>
    %31 = tpu.matmul %29, %30, %cst_15 {dimension_numbers = #tpu.dot_dimension_numbers<[1], [0], [0], [1], [0, 0, 1, 1], [], []>} : vector<8x8xf32>, vector<8x8xf32>, vector<8x8xf32> -> vector<8x8xf32>
    %32 = vector.extract_strided_slice %7 {offsets = [0, 1], sizes = [8, 1], strides = [1, 1]} : vector<8x8xf32> to vector<8x1xf32>
    %33 = vector.extract_strided_slice %5 {offsets = [1, 0], sizes = [1, 8], strides = [1, 1]} : vector<8x8xf32> to vector<1x8xf32>
    %34 = vector.broadcast %32 : vector<8x1xf32> to vector<8x8xf32>
    %35 = vector.broadcast %33 : vector<1x8xf32> to vector<8x8xf32>
    %36 = arith.addf %34, %35 : vector<8x8xf32>
    %cst_16 = arith.constant 0.000000e+00 : f32
    %37 = vector.broadcast %cst_16 : f32 to vector<8x8xf32>
    %38 = arith.cmpf ogt, %36, %37 : vector<8x8xf32>
    %cst_17 = arith.constant 2.000000e-01 : f32
    %39 = vector.broadcast %cst_17 : f32 to vector<8x8xf32>
    %40 = arith.mulf %39, %36 : vector<8x8xf32>
    %41 = arith.select %38, %36, %40 : vector<8x8xi1>, vector<8x8xf32>
    %42 = arith.addf %41, %8 : vector<8x8xf32>
    %cst_18 = arith.constant dense<0xFF800000> : vector<8xf32>
    %43 = vector.multi_reduction <maximumf>, %42, %cst_18 [1] : vector<8x8xf32> to vector<8xf32>
    %44 = vector.shape_cast %43 : vector<8xf32> to vector<8x1xf32>
    %45 = vector.broadcast %44 : vector<8x1xf32> to vector<8x8xf32>
    %46 = arith.subf %42, %45 : vector<8x8xf32>
    %47 = math.exp %46 : vector<8x8xf32>
    %cst_19 = arith.constant dense<0.000000e+00> : vector<8xf32>
    %48 = vector.multi_reduction <add>, %47, %cst_19 [1] : vector<8x8xf32> to vector<8xf32>
    %49 = vector.shape_cast %48 : vector<8xf32> to vector<8x1xf32>
    %50 = tpu.reciprocal %49 {approx = true} : vector<8x1xf32> -> vector<8x1xf32>
    %51 = vector.broadcast %50 : vector<8x1xf32> to vector<8x8xf32>
    %52 = arith.mulf %47, %51 : vector<8x8xf32>
    %53 = vector.extract_strided_slice %2 {offsets = [0, 8], sizes = [8, 8], strides = [1, 1]} : vector<8x64xf32> to vector<8x8xf32>
    %cst_20 = arith.constant dense<0.000000e+00> : vector<8x8xf32>
    %54 = tpu.matmul %52, %53, %cst_20 {dimension_numbers = #tpu.dot_dimension_numbers<[1], [0], [0], [1], [0, 0, 1, 1], [], []>} : vector<8x8xf32>, vector<8x8xf32>, vector<8x8xf32> -> vector<8x8xf32>
    %55 = vector.extract_strided_slice %7 {offsets = [0, 2], sizes = [8, 1], strides = [1, 1]} : vector<8x8xf32> to vector<8x1xf32>
    %56 = vector.extract_strided_slice %5 {offsets = [2, 0], sizes = [1, 8], strides = [1, 1]} : vector<8x8xf32> to vector<1x8xf32>
    %57 = vector.broadcast %55 : vector<8x1xf32> to vector<8x8xf32>
    %58 = vector.broadcast %56 : vector<1x8xf32> to vector<8x8xf32>
    %59 = arith.addf %57, %58 : vector<8x8xf32>
    %cst_21 = arith.constant 0.000000e+00 : f32
    %60 = vector.broadcast %cst_21 : f32 to vector<8x8xf32>
    %61 = arith.cmpf ogt, %59, %60 : vector<8x8xf32>
    %cst_22 = arith.constant 2.000000e-01 : f32
    %62 = vector.broadcast %cst_22 : f32 to vector<8x8xf32>
    %63 = arith.mulf %62, %59 : vector<8x8xf32>
    %64 = arith.select %61, %59, %63 : vector<8x8xi1>, vector<8x8xf32>
    %65 = arith.addf %64, %8 : vector<8x8xf32>
    %cst_23 = arith.constant dense<0xFF800000> : vector<8xf32>
    %66 = vector.multi_reduction <maximumf>, %65, %cst_23 [1] : vector<8x8xf32> to vector<8xf32>
    %67 = vector.shape_cast %66 : vector<8xf32> to vector<8x1xf32>
    %68 = vector.broadcast %67 : vector<8x1xf32> to vector<8x8xf32>
    %69 = arith.subf %65, %68 : vector<8x8xf32>
    %70 = math.exp %69 : vector<8x8xf32>
    %cst_24 = arith.constant dense<0.000000e+00> : vector<8xf32>
    %71 = vector.multi_reduction <add>, %70, %cst_24 [1] : vector<8x8xf32> to vector<8xf32>
    %72 = vector.shape_cast %71 : vector<8xf32> to vector<8x1xf32>
    %73 = tpu.reciprocal %72 {approx = true} : vector<8x1xf32> -> vector<8x1xf32>
    %74 = vector.broadcast %73 : vector<8x1xf32> to vector<8x8xf32>
    %75 = arith.mulf %70, %74 : vector<8x8xf32>
    %76 = vector.extract_strided_slice %2 {offsets = [0, 16], sizes = [8, 8], strides = [1, 1]} : vector<8x64xf32> to vector<8x8xf32>
    %cst_25 = arith.constant dense<0.000000e+00> : vector<8x8xf32>
    %77 = tpu.matmul %75, %76, %cst_25 {dimension_numbers = #tpu.dot_dimension_numbers<[1], [0], [0], [1], [0, 0, 1, 1], [], []>} : vector<8x8xf32>, vector<8x8xf32>, vector<8x8xf32> -> vector<8x8xf32>
    %78 = vector.extract_strided_slice %7 {offsets = [0, 3], sizes = [8, 1], strides = [1, 1]} : vector<8x8xf32> to vector<8x1xf32>
    %79 = vector.extract_strided_slice %5 {offsets = [3, 0], sizes = [1, 8], strides = [1, 1]} : vector<8x8xf32> to vector<1x8xf32>
    %80 = vector.broadcast %78 : vector<8x1xf32> to vector<8x8xf32>
    %81 = vector.broadcast %79 : vector<1x8xf32> to vector<8x8xf32>
    %82 = arith.addf %80, %81 : vector<8x8xf32>
    %cst_26 = arith.constant 0.000000e+00 : f32
    %83 = vector.broadcast %cst_26 : f32 to vector<8x8xf32>
    %84 = arith.cmpf ogt, %82, %83 : vector<8x8xf32>
    %cst_27 = arith.constant 2.000000e-01 : f32
    %85 = vector.broadcast %cst_27 : f32 to vector<8x8xf32>
    %86 = arith.mulf %85, %82 : vector<8x8xf32>
    %87 = arith.select %84, %82, %86 : vector<8x8xi1>, vector<8x8xf32>
    %88 = arith.addf %87, %8 : vector<8x8xf32>
    %cst_28 = arith.constant dense<0xFF800000> : vector<8xf32>
    %89 = vector.multi_reduction <maximumf>, %88, %cst_28 [1] : vector<8x8xf32> to vector<8xf32>
    %90 = vector.shape_cast %89 : vector<8xf32> to vector<8x1xf32>
    %91 = vector.broadcast %90 : vector<8x1xf32> to vector<8x8xf32>
    %92 = arith.subf %88, %91 : vector<8x8xf32>
    %93 = math.exp %92 : vector<8x8xf32>
    %cst_29 = arith.constant dense<0.000000e+00> : vector<8xf32>
    %94 = vector.multi_reduction <add>, %93, %cst_29 [1] : vector<8x8xf32> to vector<8xf32>
    %95 = vector.shape_cast %94 : vector<8xf32> to vector<8x1xf32>
    %96 = tpu.reciprocal %95 {approx = true} : vector<8x1xf32> -> vector<8x1xf32>
    %97 = vector.broadcast %96 : vector<8x1xf32> to vector<8x8xf32>
    %98 = arith.mulf %93, %97 : vector<8x8xf32>
    %99 = vector.extract_strided_slice %2 {offsets = [0, 24], sizes = [8, 8], strides = [1, 1]} : vector<8x64xf32> to vector<8x8xf32>
    %cst_30 = arith.constant dense<0.000000e+00> : vector<8x8xf32>
    %100 = tpu.matmul %98, %99, %cst_30 {dimension_numbers = #tpu.dot_dimension_numbers<[1], [0], [0], [1], [0, 0, 1, 1], [], []>} : vector<8x8xf32>, vector<8x8xf32>, vector<8x8xf32> -> vector<8x8xf32>
    %101 = vector.extract_strided_slice %7 {offsets = [0, 4], sizes = [8, 1], strides = [1, 1]} : vector<8x8xf32> to vector<8x1xf32>
    %102 = vector.extract_strided_slice %5 {offsets = [4, 0], sizes = [1, 8], strides = [1, 1]} : vector<8x8xf32> to vector<1x8xf32>
    %103 = vector.broadcast %101 : vector<8x1xf32> to vector<8x8xf32>
    %104 = vector.broadcast %102 : vector<1x8xf32> to vector<8x8xf32>
    %105 = arith.addf %103, %104 : vector<8x8xf32>
    %cst_31 = arith.constant 0.000000e+00 : f32
    %106 = vector.broadcast %cst_31 : f32 to vector<8x8xf32>
    %107 = arith.cmpf ogt, %105, %106 : vector<8x8xf32>
    %cst_32 = arith.constant 2.000000e-01 : f32
    %108 = vector.broadcast %cst_32 : f32 to vector<8x8xf32>
    %109 = arith.mulf %108, %105 : vector<8x8xf32>
    %110 = arith.select %107, %105, %109 : vector<8x8xi1>, vector<8x8xf32>
    %111 = arith.addf %110, %8 : vector<8x8xf32>
    %cst_33 = arith.constant dense<0xFF800000> : vector<8xf32>
    %112 = vector.multi_reduction <maximumf>, %111, %cst_33 [1] : vector<8x8xf32> to vector<8xf32>
    %113 = vector.shape_cast %112 : vector<8xf32> to vector<8x1xf32>
    %114 = vector.broadcast %113 : vector<8x1xf32> to vector<8x8xf32>
    %115 = arith.subf %111, %114 : vector<8x8xf32>
    %116 = math.exp %115 : vector<8x8xf32>
    %cst_34 = arith.constant dense<0.000000e+00> : vector<8xf32>
    %117 = vector.multi_reduction <add>, %116, %cst_34 [1] : vector<8x8xf32> to vector<8xf32>
    %118 = vector.shape_cast %117 : vector<8xf32> to vector<8x1xf32>
    %119 = tpu.reciprocal %118 {approx = true} : vector<8x1xf32> -> vector<8x1xf32>
    %120 = vector.broadcast %119 : vector<8x1xf32> to vector<8x8xf32>
    %121 = arith.mulf %116, %120 : vector<8x8xf32>
    %122 = vector.extract_strided_slice %2 {offsets = [0, 32], sizes = [8, 8], strides = [1, 1]} : vector<8x64xf32> to vector<8x8xf32>
    %cst_35 = arith.constant dense<0.000000e+00> : vector<8x8xf32>
    %123 = tpu.matmul %121, %122, %cst_35 {dimension_numbers = #tpu.dot_dimension_numbers<[1], [0], [0], [1], [0, 0, 1, 1], [], []>} : vector<8x8xf32>, vector<8x8xf32>, vector<8x8xf32> -> vector<8x8xf32>
    %124 = vector.extract_strided_slice %7 {offsets = [0, 5], sizes = [8, 1], strides = [1, 1]} : vector<8x8xf32> to vector<8x1xf32>
    %125 = vector.extract_strided_slice %5 {offsets = [5, 0], sizes = [1, 8], strides = [1, 1]} : vector<8x8xf32> to vector<1x8xf32>
    %126 = vector.broadcast %124 : vector<8x1xf32> to vector<8x8xf32>
    %127 = vector.broadcast %125 : vector<1x8xf32> to vector<8x8xf32>
    %128 = arith.addf %126, %127 : vector<8x8xf32>
    %cst_36 = arith.constant 0.000000e+00 : f32
    %129 = vector.broadcast %cst_36 : f32 to vector<8x8xf32>
    %130 = arith.cmpf ogt, %128, %129 : vector<8x8xf32>
    %cst_37 = arith.constant 2.000000e-01 : f32
    %131 = vector.broadcast %cst_37 : f32 to vector<8x8xf32>
    %132 = arith.mulf %131, %128 : vector<8x8xf32>
    %133 = arith.select %130, %128, %132 : vector<8x8xi1>, vector<8x8xf32>
    %134 = arith.addf %133, %8 : vector<8x8xf32>
    %cst_38 = arith.constant dense<0xFF800000> : vector<8xf32>
    %135 = vector.multi_reduction <maximumf>, %134, %cst_38 [1] : vector<8x8xf32> to vector<8xf32>
    %136 = vector.shape_cast %135 : vector<8xf32> to vector<8x1xf32>
    %137 = vector.broadcast %136 : vector<8x1xf32> to vector<8x8xf32>
    %138 = arith.subf %134, %137 : vector<8x8xf32>
    %139 = math.exp %138 : vector<8x8xf32>
    %cst_39 = arith.constant dense<0.000000e+00> : vector<8xf32>
    %140 = vector.multi_reduction <add>, %139, %cst_39 [1] : vector<8x8xf32> to vector<8xf32>
    %141 = vector.shape_cast %140 : vector<8xf32> to vector<8x1xf32>
    %142 = tpu.reciprocal %141 {approx = true} : vector<8x1xf32> -> vector<8x1xf32>
    %143 = vector.broadcast %142 : vector<8x1xf32> to vector<8x8xf32>
    %144 = arith.mulf %139, %143 : vector<8x8xf32>
    %145 = vector.extract_strided_slice %2 {offsets = [0, 40], sizes = [8, 8], strides = [1, 1]} : vector<8x64xf32> to vector<8x8xf32>
    %cst_40 = arith.constant dense<0.000000e+00> : vector<8x8xf32>
    %146 = tpu.matmul %144, %145, %cst_40 {dimension_numbers = #tpu.dot_dimension_numbers<[1], [0], [0], [1], [0, 0, 1, 1], [], []>} : vector<8x8xf32>, vector<8x8xf32>, vector<8x8xf32> -> vector<8x8xf32>
    %147 = vector.extract_strided_slice %7 {offsets = [0, 6], sizes = [8, 1], strides = [1, 1]} : vector<8x8xf32> to vector<8x1xf32>
    %148 = vector.extract_strided_slice %5 {offsets = [6, 0], sizes = [1, 8], strides = [1, 1]} : vector<8x8xf32> to vector<1x8xf32>
    %149 = vector.broadcast %147 : vector<8x1xf32> to vector<8x8xf32>
    %150 = vector.broadcast %148 : vector<1x8xf32> to vector<8x8xf32>
    %151 = arith.addf %149, %150 : vector<8x8xf32>
    %cst_41 = arith.constant 0.000000e+00 : f32
    %152 = vector.broadcast %cst_41 : f32 to vector<8x8xf32>
    %153 = arith.cmpf ogt, %151, %152 : vector<8x8xf32>
    %cst_42 = arith.constant 2.000000e-01 : f32
    %154 = vector.broadcast %cst_42 : f32 to vector<8x8xf32>
    %155 = arith.mulf %154, %151 : vector<8x8xf32>
    %156 = arith.select %153, %151, %155 : vector<8x8xi1>, vector<8x8xf32>
    %157 = arith.addf %156, %8 : vector<8x8xf32>
    %cst_43 = arith.constant dense<0xFF800000> : vector<8xf32>
    %158 = vector.multi_reduction <maximumf>, %157, %cst_43 [1] : vector<8x8xf32> to vector<8xf32>
    %159 = vector.shape_cast %158 : vector<8xf32> to vector<8x1xf32>
    %160 = vector.broadcast %159 : vector<8x1xf32> to vector<8x8xf32>
    %161 = arith.subf %157, %160 : vector<8x8xf32>
    %162 = math.exp %161 : vector<8x8xf32>
    %cst_44 = arith.constant dense<0.000000e+00> : vector<8xf32>
    %163 = vector.multi_reduction <add>, %162, %cst_44 [1] : vector<8x8xf32> to vector<8xf32>
    %164 = vector.shape_cast %163 : vector<8xf32> to vector<8x1xf32>
    %165 = tpu.reciprocal %164 {approx = true} : vector<8x1xf32> -> vector<8x1xf32>
    %166 = vector.broadcast %165 : vector<8x1xf32> to vector<8x8xf32>
    %167 = arith.mulf %162, %166 : vector<8x8xf32>
    %168 = vector.extract_strided_slice %2 {offsets = [0, 48], sizes = [8, 8], strides = [1, 1]} : vector<8x64xf32> to vector<8x8xf32>
    %cst_45 = arith.constant dense<0.000000e+00> : vector<8x8xf32>
    %169 = tpu.matmul %167, %168, %cst_45 {dimension_numbers = #tpu.dot_dimension_numbers<[1], [0], [0], [1], [0, 0, 1, 1], [], []>} : vector<8x8xf32>, vector<8x8xf32>, vector<8x8xf32> -> vector<8x8xf32>
    %170 = vector.extract_strided_slice %7 {offsets = [0, 7], sizes = [8, 1], strides = [1, 1]} : vector<8x8xf32> to vector<8x1xf32>
    %171 = vector.extract_strided_slice %5 {offsets = [7, 0], sizes = [1, 8], strides = [1, 1]} : vector<8x8xf32> to vector<1x8xf32>
    %172 = vector.broadcast %170 : vector<8x1xf32> to vector<8x8xf32>
    %173 = vector.broadcast %171 : vector<1x8xf32> to vector<8x8xf32>
    %174 = arith.addf %172, %173 : vector<8x8xf32>
    %cst_46 = arith.constant 0.000000e+00 : f32
    %175 = vector.broadcast %cst_46 : f32 to vector<8x8xf32>
    %176 = arith.cmpf ogt, %174, %175 : vector<8x8xf32>
    %cst_47 = arith.constant 2.000000e-01 : f32
    %177 = vector.broadcast %cst_47 : f32 to vector<8x8xf32>
    %178 = arith.mulf %177, %174 : vector<8x8xf32>
    %179 = arith.select %176, %174, %178 : vector<8x8xi1>, vector<8x8xf32>
    %180 = arith.addf %179, %8 : vector<8x8xf32>
    %cst_48 = arith.constant dense<0xFF800000> : vector<8xf32>
    %181 = vector.multi_reduction <maximumf>, %180, %cst_48 [1] : vector<8x8xf32> to vector<8xf32>
    %182 = vector.shape_cast %181 : vector<8xf32> to vector<8x1xf32>
    %183 = vector.broadcast %182 : vector<8x1xf32> to vector<8x8xf32>
    %184 = arith.subf %180, %183 : vector<8x8xf32>
    %185 = math.exp %184 : vector<8x8xf32>
    %cst_49 = arith.constant dense<0.000000e+00> : vector<8xf32>
    %186 = vector.multi_reduction <add>, %185, %cst_49 [1] : vector<8x8xf32> to vector<8xf32>
    %187 = vector.shape_cast %186 : vector<8xf32> to vector<8x1xf32>
    %188 = tpu.reciprocal %187 {approx = true} : vector<8x1xf32> -> vector<8x1xf32>
    %189 = vector.broadcast %188 : vector<8x1xf32> to vector<8x8xf32>
    %190 = arith.mulf %185, %189 : vector<8x8xf32>
    %191 = vector.extract_strided_slice %2 {offsets = [0, 56], sizes = [8, 8], strides = [1, 1]} : vector<8x64xf32> to vector<8x8xf32>
    %cst_50 = arith.constant dense<0.000000e+00> : vector<8x8xf32>
    %192 = tpu.matmul %190, %191, %cst_50 {dimension_numbers = #tpu.dot_dimension_numbers<[1], [0], [0], [1], [0, 0, 1, 1], [], []>} : vector<8x8xf32>, vector<8x8xf32>, vector<8x8xf32> -> vector<8x8xf32>
    %193 = tpu.concatenate %31, %54, %77, %100, %123, %146, %169, %192 in 1 : vector<8x8xf32>, vector<8x8xf32>, vector<8x8xf32>, vector<8x8xf32>, vector<8x8xf32>, vector<8x8xf32>, vector<8x8xf32>, vector<8x8xf32> -> vector<8x64xf32>
    %c0_51 = arith.constant 0 : index
    %c0_52 = arith.constant 0 : index
    %194 = vector.load %arg5[%c0_51, %c0_52] : memref<1x64xf32, #tpu.memory_space<vmem>>, vector<1x64xf32>
    %195 = vector.broadcast %194 : vector<1x64xf32> to vector<8x64xf32>
    %196 = arith.addf %193, %195 : vector<8x64xf32>
    %cst_53 = arith.constant 0.000000e+00 : f32
    %197 = vector.broadcast %cst_53 : f32 to vector<8x64xf32>
    %198 = arith.cmpf ogt, %196, %197 : vector<8x64xf32>
    %199 = math.exp %196 : vector<8x64xf32>
    %cst_54 = arith.constant 1.000000e+00 : f32
    %200 = vector.broadcast %cst_54 : f32 to vector<8x64xf32>
    %201 = arith.subf %199, %200 : vector<8x64xf32>
    %202 = arith.select %198, %196, %201 : vector<8x64xi1>, vector<8x64xf32>
    %c0_55 = arith.constant 0 : index
    %c0_56 = arith.constant 0 : index
    %203 = vector.load %arg7[%c0_55, %c0_56] : memref<8x64xf32, #tpu.memory_space<vmem>>, vector<8x64xf32>
    tpu.vector_store %arg7[%c0_55, %c0_56], %202 {strides = array<i32>} : memref<8x64xf32, #tpu.memory_space<vmem>>, vector<8x64xf32>,
    return
  }
  func.func @transform_0(%arg0: i32) -> (i32, i32) {
    %c0_i32 = arith.constant 0 : i32
    %c0_i32_0 = arith.constant 0 : i32
    %c0_i32_1 = arith.constant 0 : i32
    return %c0_i32, %c0_i32_0 : i32, i32
  }
  func.func @transform_1(%arg0: i32) -> (i32, i32) {
    %c0_i32 = arith.constant 0 : i32
    %c0_i32_0 = arith.constant 0 : i32
    %c0_i32_1 = arith.constant 0 : i32
    return %c0_i32, %c0_i32_0 : i32, i32
  }
  func.func @transform_2(%arg0: i32) -> (i32, i32) {
    %c0_i32 = arith.constant 0 : i32
    %c0_i32_0 = arith.constant 0 : i32
    %c0_i32_1 = arith.constant 0 : i32
    return %c0_i32, %c0_i32_0 : i32, i32
  }
  func.func @transform_3(%arg0: i32) -> (i32, i32) {
    %c0_i32 = arith.constant 0 : i32
    %c0_i32_0 = arith.constant 0 : i32
    %c0_i32_1 = arith.constant 0 : i32
    return %c0_i32, %c0_i32_0 : i32, i32
  }
  func.func @transform_4(%arg0: i32) -> (i32, i32) {
    %c0_i32 = arith.constant 0 : i32
    %c0_i32_0 = arith.constant 0 : i32
    %c0_i32_1 = arith.constant 0 : i32
    return %c0_i32, %c0_i32_0 : i32, i32
  }
  func.func @transform_5(%arg0: i32) -> (i32, i32) {
    %c0_i32 = arith.constant 0 : i32
    %c0_i32_0 = arith.constant 0 : i32
    return %arg0, %c0_i32 : i32, i32
  }
  func.func @transform_6(%arg0: i32) -> (i32, i32) {
    %c0_i32 = arith.constant 0 : i32
    %c0_i32_0 = arith.constant 0 : i32
    return %arg0, %c0_i32 : i32, i32
  }
}

module attributes {stable_mosaic.version = 11 : i64} {
  func.func @gat_layer_kernel(%arg0: i32, %arg1: memref<8x64xf32, #tpu.memory_space<vmem>>, %arg2: memref<64x128xf32, #tpu.memory_space<vmem>>, %arg3: memref<128x1xf32, #tpu.memory_space<vmem>>, %arg4: memref<128x1xf32, #tpu.memory_space<vmem>>, %arg5: memref<1x128xf32, #tpu.memory_space<vmem>>, %arg6: memref<8x8xf32, #tpu.memory_space<vmem>>, %arg7: memref<8x128xf32, #tpu.memory_space<vmem>>) attributes {dimension_semantics = [#tpu.dimension_semantics<parallel>], iteration_bounds = array<i64: 1>, scalar_prefetch = 0 : i64, scratch_operands = 0 : i64, tpu.core_type = #tpu.core_type<tc>, window_params = [{pipeline_mode = #tpu.pipeline_mode<synchronous>, transform_indices = @transform_0, window_bounds = array<i64: 8, 64>}, {pipeline_mode = #tpu.pipeline_mode<synchronous>, transform_indices = @transform_1, window_bounds = array<i64: 64, 128>}, {pipeline_mode = #tpu.pipeline_mode<synchronous>, transform_indices = @transform_2, window_bounds = array<i64: 128, 1>}, {pipeline_mode = #tpu.pipeline_mode<synchronous>, transform_indices = @transform_3, window_bounds = array<i64: 128, 1>}, {pipeline_mode = #tpu.pipeline_mode<synchronous>, transform_indices = @transform_4, window_bounds = array<i64: 1, 128>}, {transform_indices = @transform_5, window_bounds = array<i64: 8, 8>}, {transform_indices = @transform_6, window_bounds = array<i64: 8, 128>}]} {
    %c0 = arith.constant 0 : index
    %c0_0 = arith.constant 0 : index
    %0 = vector.load %arg1[%c0, %c0_0] : memref<8x64xf32, #tpu.memory_space<vmem>>, vector<8x64xf32>
    %c0_1 = arith.constant 0 : index
    %c0_2 = arith.constant 0 : index
    %1 = vector.load %arg2[%c0_1, %c0_2] : memref<64x128xf32, #tpu.memory_space<vmem>>, vector<64x128xf32>
    %cst = arith.constant dense<0.000000e+00> : vector<8x128xf32>
    %2 = tpu.matmul %0, %1, %cst {dimension_numbers = #tpu.dot_dimension_numbers<[1], [0], [0], [1], [0, 0, 1, 1], [], []>} : vector<8x64xf32>, vector<64x128xf32>, vector<8x128xf32> -> vector<8x128xf32>
    %c0_3 = arith.constant 0 : index
    %c0_4 = arith.constant 0 : index
    %3 = vector.load %arg3[%c0_3, %c0_4] : memref<128x1xf32, #tpu.memory_space<vmem>>, vector<128x1xf32>
    %cst_5 = arith.constant dense<0.000000e+00> : vector<8x1xf32>
    %4 = tpu.matmul %2, %3, %cst_5 {dimension_numbers = #tpu.dot_dimension_numbers<[1], [0], [0], [1], [0, 0, 1, 1], [], []>} : vector<8x128xf32>, vector<128x1xf32>, vector<8x1xf32> -> vector<8x1xf32>
    %5 = tpu.transpose %4, [1, 0] : vector<8x1xf32> -> vector<1x8xf32>
    %c0_6 = arith.constant 0 : index
    %c0_7 = arith.constant 0 : index
    %6 = vector.load %arg4[%c0_6, %c0_7] : memref<128x1xf32, #tpu.memory_space<vmem>>, vector<128x1xf32>
    %cst_8 = arith.constant dense<0.000000e+00> : vector<8x1xf32>
    %7 = tpu.matmul %2, %6, %cst_8 {dimension_numbers = #tpu.dot_dimension_numbers<[1], [0], [0], [1], [0, 0, 1, 1], [], []>} : vector<8x128xf32>, vector<128x1xf32>, vector<8x1xf32> -> vector<8x1xf32>
    %c0_9 = arith.constant 0 : index
    %c0_10 = arith.constant 0 : index
    %8 = vector.load %arg6[%c0_9, %c0_10] : memref<8x8xf32, #tpu.memory_space<vmem>>, vector<8x8xf32>
    %9 = vector.broadcast %7 : vector<8x1xf32> to vector<8x8xf32>
    %10 = vector.broadcast %5 : vector<1x8xf32> to vector<8x8xf32>
    %11 = arith.addf %9, %10 : vector<8x8xf32>
    %cst_11 = arith.constant 0.000000e+00 : f32
    %12 = vector.broadcast %cst_11 : f32 to vector<8x8xf32>
    %13 = arith.cmpf ogt, %11, %12 : vector<8x8xf32>
    %cst_12 = arith.constant 2.000000e-01 : f32
    %14 = vector.broadcast %cst_12 : f32 to vector<8x8xf32>
    %15 = arith.mulf %14, %11 : vector<8x8xf32>
    %16 = arith.select %13, %11, %15 : vector<8x8xi1>, vector<8x8xf32>
    %17 = arith.addf %16, %8 : vector<8x8xf32>
    %cst_13 = arith.constant dense<0xFF800000> : vector<8xf32>
    %18 = vector.multi_reduction <maximumf>, %17, %cst_13 [1] : vector<8x8xf32> to vector<8xf32>
    %19 = vector.shape_cast %18 : vector<8xf32> to vector<8x1xf32>
    %20 = vector.broadcast %19 : vector<8x1xf32> to vector<8x8xf32>
    %21 = arith.subf %17, %20 : vector<8x8xf32>
    %22 = math.exp %21 : vector<8x8xf32>
    %cst_14 = arith.constant dense<0.000000e+00> : vector<8xf32>
    %23 = vector.multi_reduction <add>, %22, %cst_14 [1] : vector<8x8xf32> to vector<8xf32>
    %24 = vector.shape_cast %23 : vector<8xf32> to vector<8x1xf32>
    %25 = tpu.reciprocal %24 {approx = true} : vector<8x1xf32> -> vector<8x1xf32>
    %26 = vector.broadcast %25 : vector<8x1xf32> to vector<8x8xf32>
    %27 = arith.mulf %22, %26 : vector<8x8xf32>
    %cst_15 = arith.constant dense<0.000000e+00> : vector<8x128xf32>
    %28 = tpu.matmul %27, %2, %cst_15 {dimension_numbers = #tpu.dot_dimension_numbers<[1], [0], [0], [1], [0, 0, 1, 1], [], []>} : vector<8x8xf32>, vector<8x128xf32>, vector<8x128xf32> -> vector<8x128xf32>
    %c0_16 = arith.constant 0 : index
    %c0_17 = arith.constant 0 : index
    %29 = vector.load %arg5[%c0_16, %c0_17] : memref<1x128xf32, #tpu.memory_space<vmem>>, vector<1x128xf32>
    %30 = vector.broadcast %29 : vector<1x128xf32> to vector<8x128xf32>
    %31 = arith.addf %28, %30 : vector<8x128xf32>
    %32 = tpu.iota {dimensions = array<i32: 1>} : vector<8x128xi32>
    %c4_i32 = arith.constant 4 : i32
    %33 = vector.broadcast %c4_i32 : i32 to vector<8x128xi32>
    %34 = arith.cmpi slt, %32, %33 : vector<8x128xi32>
    %cst_18 = arith.constant -1.000000e+30 : f32
    %35 = vector.broadcast %cst_18 : f32 to vector<8x128xf32>
    %36 = arith.select %34, %31, %35 : vector<8x128xi1>, vector<8x128xf32>
    %cst_19 = arith.constant dense<0xFF800000> : vector<8xf32>
    %37 = vector.multi_reduction <maximumf>, %36, %cst_19 [1] : vector<8x128xf32> to vector<8xf32>
    %38 = vector.shape_cast %37 : vector<8xf32> to vector<8x1xf32>
    %39 = vector.broadcast %38 : vector<8x1xf32> to vector<8x128xf32>
    %40 = arith.subf %36, %39 : vector<8x128xf32>
    %41 = math.exp %40 : vector<8x128xf32>
    %cst_20 = arith.constant dense<0.000000e+00> : vector<8xf32>
    %42 = vector.multi_reduction <add>, %41, %cst_20 [1] : vector<8x128xf32> to vector<8xf32>
    %43 = vector.shape_cast %42 : vector<8xf32> to vector<8x1xf32>
    %44 = math.log %43 : vector<8x1xf32>
    %45 = arith.addf %38, %44 : vector<8x1xf32>
    %46 = vector.broadcast %45 : vector<8x1xf32> to vector<8x128xf32>
    %47 = arith.subf %36, %46 : vector<8x128xf32>
    %c0_21 = arith.constant 0 : index
    %c0_22 = arith.constant 0 : index
    %48 = vector.load %arg7[%c0_21, %c0_22] : memref<8x128xf32, #tpu.memory_space<vmem>>, vector<8x128xf32>
    tpu.vector_store %arg7[%c0_21, %c0_22], %47 {strides = array<i32>} : memref<8x128xf32, #tpu.memory_space<vmem>>, vector<8x128xf32>,
    return
  }
  func.func @transform_0(%arg0: i32) -> (i32, i32) {
    %c0_i32 = arith.constant 0 : i32
    %c0_i32_0 = arith.constant 0 : i32
    %c0_i32_1 = arith.constant 0 : i32
    return %c0_i32, %c0_i32_0 : i32, i32
  }
  func.func @transform_1(%arg0: i32) -> (i32, i32) {
    %c0_i32 = arith.constant 0 : i32
    %c0_i32_0 = arith.constant 0 : i32
    %c0_i32_1 = arith.constant 0 : i32
    return %c0_i32, %c0_i32_0 : i32, i32
  }
  func.func @transform_2(%arg0: i32) -> (i32, i32) {
    %c0_i32 = arith.constant 0 : i32
    %c0_i32_0 = arith.constant 0 : i32
    %c0_i32_1 = arith.constant 0 : i32
    return %c0_i32, %c0_i32_0 : i32, i32
  }
  func.func @transform_3(%arg0: i32) -> (i32, i32) {
    %c0_i32 = arith.constant 0 : i32
    %c0_i32_0 = arith.constant 0 : i32
    %c0_i32_1 = arith.constant 0 : i32
    return %c0_i32, %c0_i32_0 : i32, i32
  }
  func.func @transform_4(%arg0: i32) -> (i32, i32) {
    %c0_i32 = arith.constant 0 : i32
    %c0_i32_0 = arith.constant 0 : i32
    %c0_i32_1 = arith.constant 0 : i32
    return %c0_i32, %c0_i32_0 : i32, i32
  }
  func.func @transform_5(%arg0: i32) -> (i32, i32) {
    %c0_i32 = arith.constant 0 : i32
    %c0_i32_0 = arith.constant 0 : i32
    return %arg0, %c0_i32 : i32, i32
  }
  func.func @transform_6(%arg0: i32) -> (i32, i32) {
    %c0_i32 = arith.constant 0 : i32
    %c0_i32_0 = arith.constant 0 : i32
    return %arg0, %c0_i32 : i32, i32
  }
}

</mosaic_0001>

<llo_original>
// kernel: net_forward.3
$region0: #{net_forward.3}
  #allocation0 [shape = 'u32[]', space=smem, size = 0x4, offset = 0x4, fixed_abs, tag = 'smem constant byte address 0x4 - core index']
  #allocation1 [shape = 'u32[144,128]{1,0:T(1,128)}', space=vmem, size = 0x12000, scoped, tag = 'internal scratch']
  %s0 = inlined_call_operand.vmem [shape: f32[8,64], index: 0, kind: input, shape index: {}]
  %s1 = inlined_call_operand.vmem [shape: f32[64,128], index: 1, kind: input, shape index: {}]
  %s2 = inlined_call_operand.vmem [shape: f32[128,1], index: 2, kind: input, shape index: {}]
  %s3 = inlined_call_operand.vmem [shape: f32[128,1], index: 3, kind: input, shape index: {}]
  %s4 = inlined_call_operand.vmem [shape: f32[1,128], index: 4, kind: input, shape index: {}]
  %s5 = inlined_call_operand.vmem [shape: f32[8,8], index: 5, kind: input, shape index: {}]
  %s6 = inlined_call_operand.vmem [shape: f32[8,128], index: 6, kind: output, shape index: {}]
  %s7 = sld [smem:[#allocation0]]
  $region34: #{net_forward.3} parent=0
    _
  %s9 = ssub.s32 1, %s7
  %s10 = scalar_select 0, %s9, %s7
  // Predicated region
  $region2: #{net_forward.3} parent=0 // pred_check
    _
  $region3: #{net_forward.3} parent=0 // pred_check_branch
    %12 = sbr.rel (0) target = $region5
  $region4: #{net_forward.3} parent=0 // pred_region
    _
  $region5: #{net_forward.3} parent=0 // pred_fallthru
    _
  // Predicated region
  $region6: #{net_forward.3} parent=0 // pred_check
    _
  $region7: #{net_forward.3} parent=0 // pred_check_branch
    %14 = sbr.rel (0) target = $region9
  $region8: #{net_forward.3} parent=0 // pred_region
    _
  $region9: #{net_forward.3} parent=0 // pred_fallthru
    _
  // Predicated region
  $region10: #{net_forward.3} parent=0 // pred_check
    _
  $region11: #{net_forward.3} parent=0 // pred_check_branch
    %16 = sbr.rel (0) target = $region13
  $region12: #{net_forward.3} parent=0 // pred_region
    _
  $region13: #{net_forward.3} parent=0 // pred_fallthru
    _
  // Predicated region
  $region14: #{net_forward.3} parent=0 // pred_check
    _
  $region15: #{net_forward.3} parent=0 // pred_check_branch
    %18 = sbr.rel (0) target = $region17
  $region16: #{net_forward.3} parent=0 // pred_region
    _
  $region17: #{net_forward.3} parent=0 // pred_fallthru
    _
  // Predicated region
  $region18: #{net_forward.3} parent=0 // pred_check
    _
  $region19: #{net_forward.3} parent=0 // pred_check_branch
    %20 = sbr.rel (0) target = $region21
  $region20: #{net_forward.3} parent=0 // pred_region
    _
  $region21: #{net_forward.3} parent=0 // pred_fallthru
    _
  // Predicated region
  $region22: #{net_forward.3} parent=0 // pred_check
    _
  $region23: #{net_forward.3} parent=0 // pred_check_branch
    %22 = sbr.rel (0) target = $region25
  $region24: #{net_forward.3} parent=0 // pred_region
    _
  $region25: #{net_forward.3} parent=0 // pred_fallthru
    _
  %v23 = vld [vmem:[%s0] sm:$0xff]
  %v24 = vld [vmem:[%s1] sm:$0xff]
  %v25 = vld [vmem:[%s1 + $0x8] sm:$0xff]
  %v26 = vld [vmem:[%s1 + $0x10] sm:$0xff]
  %v27 = vld [vmem:[%s1 + $0x18] sm:$0xff]
  %v28 = vld [vmem:[%s1 + $0x20] sm:$0xff]
  %v29 = vld [vmem:[%s1 + $0x28] sm:$0xff]
  %v30 = vld [vmem:[%s1 + $0x30] sm:$0xff]
  %v31 = vld [vmem:[%s1 + $0x38] sm:$0xff]
  %vm32 = vcmask 523264
  %v34 = vsel %vm32, %v23, 0
  %36 = vmatprep.subr.mxu0 0.0
  %37 = vmatpush1.msra.mxu0 0.0
  %38 = vmatprep.subr.mxu0 0.0
  %39 = vmatpush1.msra.mxu0 0.0
  %40 = vmatprep.subr.mxu0 0.0
  %41 = vmatpush1.msra.mxu0 0.0
  %42 = vmatprep.subr.mxu0 0.0
  %43 = vmatpush1.msra.mxu0 0.0
  %44 = vmatprep.subr.mxu0 0.0
  %45 = vmatpush1.msra.mxu0 0.0
  %46 = vmatprep.subr.mxu0 0.0
  %47 = vmatpush1.msra.mxu0 0.0
  %48 = vmatprep.subr.mxu0 0.0
  %49 = vmatpush1.msra.mxu0 0.0
  %50 = vmatprep.subr.mxu0 0.0
  %51 = vmatpush1.msra.mxu0 0.0
  %52 = vmatprep.subr.mxu0 0.0
  %53 = vmatpush1.msra.mxu0 %v31
  %54 = vmatprep.subr.mxu0 0.0
  %55 = vmatpush1.msra.mxu0 %v30
  %56 = vmatprep.subr.mxu0 0.0
  %57 = vmatpush1.msra.mxu0 %v29
  %58 = vmatprep.subr.mxu0 0.0
  %59 = vmatpush1.msra.mxu0 %v28
  %60 = vmatprep.subr.mxu0 0.0
  %61 = vmatpush1.msra.mxu0 %v27
  %62 = vmatprep.subr.mxu0 0.0
  %63 = vmatpush1.msra.mxu0 %v26
  %64 = vmatprep.subr.mxu0 0.0
  %65 = vmatpush1.msra.mxu0 %v25
  %66 = vmatprep.subr.mxu0 0.0
  %67 = vmatpush1.msra.mxu0 %v24
  %68 = vmatprep.subr.mxu0 0.0
  %69 = vmatpush2.msra.mxu0 0.0
  %70 = vmatprep.subr.mxu0 0.0
  %71 = vmatpush2.msra.mxu0 0.0
  %72 = vmatprep.subr.mxu0 0.0
  %73 = vmatpush2.msra.mxu0 0.0
  %74 = vmatprep.subr.mxu0 0.0
  %75 = vmatpush2.msra.mxu0 0.0
  %76 = vmatprep.subr.mxu0 0.0
  %77 = vmatpush2.msra.mxu0 0.0
  %78 = vmatprep.subr.mxu0 0.0
  %79 = vmatpush2.msra.mxu0 0.0
  %80 = vmatprep.subr.mxu0 0.0
  %81 = vmatpush2.msra.mxu0 0.0
  %82 = vmatprep.subr.mxu0 0.0
  %83 = vmatpush2.msra.mxu0 0.0
  %84 = vmatprep.subr.mxu0 0.0
  %85 = vmatpush2.msra.mxu0 0.0
  %86 = vmatprep.subr.mxu0 0.0
  %87 = vmatpush2.msra.mxu0 0.0
  %88 = vmatprep.subr.mxu0 0.0
  %89 = vmatpush2.msra.mxu0 0.0
  %90 = vmatprep.subr.mxu0 0.0
  %91 = vmatpush2.msra.mxu0 0.0
  %92 = vmatprep.subr.mxu0 0.0
  %93 = vmatpush2.msra.mxu0 0.0
  %94 = vmatprep.subr.mxu0 0.0
  %95 = vmatpush2.msra.mxu0 0.0
  %96 = vmatprep.subr.mxu0 0.0
  %97 = vmatpush2.msra.mxu0 0.0
  %98 = vmatprep.subr.mxu0 0.0
  %99 = vmatpush2.msra.mxu0 0.0
  %100 = vmatprep.mubr.f32.mxu0 0.0
  %101 = vmatmul.mubr.f32.gmra.mxu0 %v34
  %v102 = vpop.f32.mrf.mxu0
  %v103 = vadd.f32 0.0, %v102
  %v104 = vpop.f32.mrf.mxu0
  %105 = vdwg.mxu0
  %v106 = vld [vmem:[%s2] sm:$0xff]
  %v107 = vld [vmem:[%s2 + $0x8] sm:$0xff]
  %v108 = vld [vmem:[%s2 + $0x10] sm:$0xff]
  %v109 = vld [vmem:[%s2 + $0x18] sm:$0xff]
  %v110 = vld [vmem:[%s2 + $0x20] sm:$0xff]
  %v111 = vld [vmem:[%s2 + $0x28] sm:$0xff]
  %v112 = vld [vmem:[%s2 + $0x30] sm:$0xff]
  %v113 = vld [vmem:[%s2 + $0x38] sm:$0xff]
  %v114 = vld [vmem:[%s2 + $0x40] sm:$0xff]
  %v115 = vld [vmem:[%s2 + $0x48] sm:$0xff]
  %v116 = vld [vmem:[%s2 + $0x50] sm:$0xff]
  %v117 = vld [vmem:[%s2 + $0x58] sm:$0xff]
  %v118 = vld [vmem:[%s2 + $0x60] sm:$0xff]
  %v119 = vld [vmem:[%s2 + $0x68] sm:$0xff]
  %v120 = vld [vmem:[%s2 + $0x70] sm:$0xff]
  %v121 = vld [vmem:[%s2 + $0x78] sm:$0xff]
  %122 = vmatprep.subr.mxu0 0.0
  %123 = vmatpush1.msra.mxu0 %v121
  %124 = vmatprep.subr.mxu0 0.0
  %125 = vmatpush1.msra.mxu0 %v120
  %126 = vmatprep.subr.mxu0 0.0
  %127 = vmatpush1.msra.mxu0 %v119
  %128 = vmatprep.subr.mxu0 0.0
  %129 = vmatpush1.msra.mxu0 %v118
  %130 = vmatprep.subr.mxu0 0.0
  %131 = vmatpush1.msra.mxu0 %v117
  %132 = vmatprep.subr.mxu0 0.0
  %133 = vmatpush1.msra.mxu0 %v116
  %134 = vmatprep.subr.mxu0 0.0
  %135 = vmatpush1.msra.mxu0 %v115
  %136 = vmatprep.subr.mxu0 0.0
  %137 = vmatpush1.msra.mxu0 %v114
  %138 = vmatprep.subr.mxu0 0.0
  %139 = vmatpush1.msra.mxu0 %v113
  %140 = vmatprep.subr.mxu0 0.0
  %141 = vmatpush1.msra.mxu0 %v112
  %142 = vmatprep.subr.mxu0 0.0
  %143 = vmatpush1.msra.mxu0 %v111
  %144 = vmatprep.subr.mxu0 0.0
  %145 = vmatpush1.msra.mxu0 %v110
  %146 = vmatprep.subr.mxu0 0.0
  %147 = vmatpush1.msra.mxu0 %v109
  %148 = vmatprep.subr.mxu0 0.0
  %149 = vmatpush1.msra.mxu0 %v108
  %150 = vmatprep.subr.mxu0 0.0
  %151 = vmatpush1.msra.mxu0 %v107
  %152 = vmatprep.subr.mxu0 0.0
  %153 = vmatpush1.msra.mxu0 %v106
  %154 = vmatprep.subr.mxu0 0.0
  %155 = vmatpush2.msra.mxu0 0.0
  %156 = vmatprep.subr.mxu0 0.0
  %157 = vmatpush2.msra.mxu0 0.0
  %158 = vmatprep.subr.mxu0 0.0
  %159 = vmatpush2.msra.mxu0 0.0
  %160 = vmatprep.subr.mxu0 0.0
  %161 = vmatpush2.msra.mxu0 0.0
  %162 = vmatprep.subr.mxu0 0.0
  %163 = vmatpush2.msra.mxu0 0.0
  %164 = vmatprep.subr.mxu0 0.0
  %165 = vmatpush2.msra.mxu0 0.0
  %166 = vmatprep.subr.mxu0 0.0
  %167 = vmatpush2.msra.mxu0 0.0
  %168 = vmatprep.subr.mxu0 0.0
  %169 = vmatpush2.msra.mxu0 0.0
  %170 = vmatprep.subr.mxu0 0.0
  %171 = vmatpush2.msra.mxu0 0.0
  %172 = vmatprep.subr.mxu0 0.0
  %173 = vmatpush2.msra.mxu0 0.0
  %174 = vmatprep.subr.mxu0 0.0
  %175 = vmatpush2.msra.mxu0 0.0
  %176 = vmatprep.subr.mxu0 0.0
  %177 = vmatpush2.msra.mxu0 0.0
  %178 = vmatprep.subr.mxu0 0.0
  %179 = vmatpush2.msra.mxu0 0.0
  %180 = vmatprep.subr.mxu0 0.0
  %181 = vmatpush2.msra.mxu0 0.0
  %182 = vmatprep.subr.mxu0 0.0
  %183 = vmatpush2.msra.mxu0 0.0
  %184 = vmatprep.subr.mxu0 0.0
  %185 = vmatpush2.msra.mxu0 0.0
  %186 = vmatprep.mubr.f32.mxu0 0.0
  %187 = vmatmul.mubr.f32.gmra.mxu0 %v103
  %v188 = vpop.f32.mrf.mxu0
  %v189 = vadd.f32 0.0, %v188
  %v190 = vpop.f32.mrf.mxu0
  %191 = vdwg.mxu0
  %192 = vxpose.xlu0.b32.start [1/16] %v189, 128
  %193 = vxpose.xlu0.b32.cont [2/16] 0.0, 128
  %194 = vxpose.xlu0.b32.cont [3/16] 0.0, 128
  %195 = vxpose.xlu0.b32.cont [4/16] 0.0, 128
  %196 = vxpose.xlu0.b32.cont [5/16] 0.0, 128
  %197 = vxpose.xlu0.b32.cont [6/16] 0.0, 128
  %198 = vxpose.xlu0.b32.cont [7/16] 0.0, 128
  %199 = vxpose.xlu0.b32.cont [8/16] 0.0, 128
  %200 = vxpose.xlu0.b32.cont [9/16] 0.0, 128
  %201 = vxpose.xlu0.b32.cont [10/16] 0.0, 128
  %202 = vxpose.xlu0.b32.cont [11/16] 0.0, 128
  %203 = vxpose.xlu0.b32.cont [12/16] 0.0, 128
  %204 = vxpose.xlu0.b32.cont [13/16] 0.0, 128
  %205 = vxpose.xlu0.b32.cont [14/16] 0.0, 128
  %206 = vxpose.xlu0.b32.cont [15/16] 0.0, 128
  %207 = vxpose.xlu0.b32.end [16/16] 0.0, 128
  %v208 = vpop.trf.xlu0
  %v209 = vpop.trf.xlu0
  %v210 = vpop.trf.xlu0
  %v211 = vpop.trf.xlu0
  %v212 = vpop.trf.xlu0
  %v213 = vpop.trf.xlu0
  %v214 = vpop.trf.xlu0
  %v215 = vpop.trf.xlu0
  %v216 = vpop.trf.xlu0
  %v217 = vpop.trf.xlu0
  %v218 = vpop.trf.xlu0
  %v219 = vpop.trf.xlu0
  %v220 = vpop.trf.xlu0
  %v221 = vpop.trf.xlu0
  %v222 = vpop.trf.xlu0
  %v223 = vpop.trf.xlu0
  %v224 = vld [vmem:[%s3] sm:$0xff]
  %v225 = vld [vmem:[%s3 + $0x8] sm:$0xff]
  %v226 = vld [vmem:[%s3 + $0x10] sm:$0xff]
  %v227 = vld [vmem:[%s3 + $0x18] sm:$0xff]
  %v228 = vld [vmem:[%s3 + $0x20] sm:$0xff]
  %v229 = vld [vmem:[%s3 + $0x28] sm:$0xff]
  %v230 = vld [vmem:[%s3 + $0x30] sm:$0xff]
  %v231 = vld [vmem:[%s3 + $0x38] sm:$0xff]
  %v232 = vld [vmem:[%s3 + $0x40] sm:$0xff]
  %v233 = vld [vmem:[%s3 + $0x48] sm:$0xff]
  %v234 = vld [vmem:[%s3 + $0x50] sm:$0xff]
  %v235 = vld [vmem:[%s3 + $0x58] sm:$0xff]
  %v236 = vld [vmem:[%s3 + $0x60] sm:$0xff]
  %v237 = vld [vmem:[%s3 + $0x68] sm:$0xff]
  %v238 = vld [vmem:[%s3 + $0x70] sm:$0xff]
  %v239 = vld [vmem:[%s3 + $0x78] sm:$0xff]
  %240 = vmatprep.subr.mxu0 0.0
  %241 = vmatpush1.msra.mxu0 %v239
  %242 = vmatprep.subr.mxu0 0.0
  %243 = vmatpush1.msra.mxu0 %v238
  %244 = vmatprep.subr.mxu0 0.0
  %245 = vmatpush1.msra.mxu0 %v237
  %246 = vmatprep.subr.mxu0 0.0
  %247 = vmatpush1.msra.mxu0 %v236
  %248 = vmatprep.subr.mxu0 0.0
  %249 = vmatpush1.msra.mxu0 %v235
  %250 = vmatprep.subr.mxu0 0.0
  %251 = vmatpush1.msra.mxu0 %v234
  %252 = vmatprep.subr.mxu0 0.0
  %253 = vmatpush1.msra.mxu0 %v233
  %254 = vmatprep.subr.mxu0 0.0
  %255 = vmatpush1.msra.mxu0 %v232
  %256 = vmatprep.subr.mxu0 0.0
  %257 = vmatpush1.msra.mxu0 %v231
  %258 = vmatprep.subr.mxu0 0.0
  %259 = vmatpush1.msra.mxu0 %v230
  %260 = vmatprep.subr.mxu0 0.0
  %261 = vmatpush1.msra.mxu0 %v229
  %262 = vmatprep.subr.mxu0 0.0
  %263 = vmatpush1.msra.mxu0 %v228
  %264 = vmatprep.subr.mxu0 0.0
  %265 = vmatpush1.msra.mxu0 %v227
  %266 = vmatprep.subr.mxu0 0.0
  %267 = vmatpush1.msra.mxu0 %v226
  %268 = vmatprep.subr.mxu0 0.0
  %269 = vmatpush1.msra.mxu0 %v225
  %270 = vmatprep.subr.mxu0 0.0
  %271 = vmatpush1.msra.mxu0 %v224
  %272 = vmatprep.subr.mxu0 0.0
  %273 = vmatpush2.msra.mxu0 0.0
  %274 = vmatprep.subr.mxu0 0.0
  %275 = vmatpush2.msra.mxu0 0.0
  %276 = vmatprep.subr.mxu0 0.0
  %277 = vmatpush2.msra.mxu0 0.0
  %278 = vmatprep.subr.mxu0 0.0
  %279 = vmatpush2.msra.mxu0 0.0
  %280 = vmatprep.subr.mxu0 0.0
  %281 = vmatpush2.msra.mxu0 0.0
  %282 = vmatprep.subr.mxu0 0.0
  %283 = vmatpush2.msra.mxu0 0.0
  %284 = vmatprep.subr.mxu0 0.0
  %285 = vmatpush2.msra.mxu0 0.0
  %286 = vmatprep.subr.mxu0 0.0
  %287 = vmatpush2.msra.mxu0 0.0
  %288 = vmatprep.subr.mxu0 0.0
  %289 = vmatpush2.msra.mxu0 0.0
  %290 = vmatprep.subr.mxu0 0.0
  %291 = vmatpush2.msra.mxu0 0.0
  %292 = vmatprep.subr.mxu0 0.0
  %293 = vmatpush2.msra.mxu0 0.0
  %294 = vmatprep.subr.mxu0 0.0
  %295 = vmatpush2.msra.mxu0 0.0
  %296 = vmatprep.subr.mxu0 0.0
  %297 = vmatpush2.msra.mxu0 0.0
  %298 = vmatprep.subr.mxu0 0.0
  %299 = vmatpush2.msra.mxu0 0.0
  %300 = vmatprep.subr.mxu0 0.0
  %301 = vmatpush2.msra.mxu0 0.0
  %302 = vmatprep.subr.mxu0 0.0
  %303 = vmatpush2.msra.mxu0 0.0
  %304 = vmatprep.mubr.f32.mxu0 0.0
  %305 = vmatmul.mubr.f32.gmra.mxu0 %v103
  %v306 = vpop.f32.mrf.mxu0
  %v307 = vadd.f32 0.0, %v306
  %v308 = vpop.f32.mrf.mxu0
  %309 = vdwg.mxu0
  %v310 = vld [vmem:[%s5] sm:$0xff]
  %312 = vset.pattern.permute.xlu0 0
  %313 = vperm.xlu0 %312, %v307
  %v314 = vpop.permute.xlu0 %313
  %v316 = vlaneseq
  %v317 = vshrl.u32 %v316, 7
  %v318 = vsub.s32 0, %v317
  %v319 = vrot.slane %v208, %v318
  %v320 = vadd.f32 %v314, %v319
  %vm321 = vcmp.gt.f32.partialorder %v320, 0.0
  %v322 = vmul.f32 %v320, 0.2
  %v323 = vsel %vm321, %v320, %v322
  %v324 = vadd.f32 %v323, %v310
  %vm325 = vcmask 64512
  %v326 = vsel %vm325, %v324, -inf
  %327 = vmax.xlane.f32.xlu0 %v326
  %v328 = vpop.xlane.xlu0 %327
  %v329 = vsub.f32 %v324, %v328
  %v330 = vmul.f32 %v329, 1.442695
  %v331 = vpow.pop %v330
  %v332 = vsel %vm325, %v331, 0.0
  %333 = vadd.xlane.f32.xlu0 %v332
  %v334 = vpop.xlane.xlu0 %333
  %v335 = vrcp.pop %v334
  %v336 = vmul.f32 %v331, %v335
  %v337 = vld [vmem:[%s4] sm:$0x1]
  %v339 = vlaneseq
  %v340 = vshrl.u32 %v339, 7
  %v341 = vsub.s32 0, %v340
  %v342 = vrot.slane %v337, %v341
  %v345 = vsel %vm325, %v336, 0
  %347 = vmatprep.subr.mxu0 0.0
  %348 = vmatpush1.msra.mxu0 0.0
  %349 = vmatprep.subr.mxu0 0.0
  %350 = vmatpush1.msra.mxu0 0.0
  %351 = vmatprep.subr.mxu0 0.0
  %352 = vmatpush1.msra.mxu0 0.0
  %353 = vmatprep.subr.mxu0 0.0
  %354 = vmatpush1.msra.mxu0 0.0
  %355 = vmatprep.subr.mxu0 0.0
  %356 = vmatpush1.msra.mxu0 0.0
  %357 = vmatprep.subr.mxu0 0.0
  %358 = vmatpush1.msra.mxu0 0.0
  %359 = vmatprep.subr.mxu0 0.0
  %360 = vmatpush1.msra.mxu0 0.0
  %361 = vmatprep.subr.mxu0 0.0
  %362 = vmatpush1.msra.mxu0 0.0
  %363 = vmatprep.subr.mxu0 0.0
  %364 = vmatpush1.msra.mxu0 0.0
  %365 = vmatprep.subr.mxu0 0.0
  %366 = vmatpush1.msra.mxu0 0.0
  %367 = vmatprep.subr.mxu0 0.0
  %368 = vmatpush1.msra.mxu0 0.0
  %369 = vmatprep.subr.mxu0 0.0
  %370 = vmatpush1.msra.mxu0 0.0
  %371 = vmatprep.subr.mxu0 0.0
  %372 = vmatpush1.msra.mxu0 0.0
  %373 = vmatprep.subr.mxu0 0.0
  %374 = vmatpush1.msra.mxu0 0.0
  %375 = vmatprep.subr.mxu0 0.0
  %376 = vmatpush1.msra.mxu0 0.0
  %377 = vmatprep.subr.mxu0 0.0
  %378 = vmatpush1.msra.mxu0 %v103
  %379 = vmatprep.subr.mxu0 0.0
  %380 = vmatpush2.msra.mxu0 0.0
  %381 = vmatprep.subr.mxu0 0.0
  %382 = vmatpush2.msra.mxu0 0.0
  %383 = vmatprep.subr.mxu0 0.0
  %384 = vmatpush2.msra.mxu0 0.0
  %385 = vmatprep.subr.mxu0 0.0
  %386 = vmatpush2.msra.mxu0 0.0
  %387 = vmatprep.subr.mxu0 0.0
  %388 = vmatpush2.msra.mxu0 0.0
  %389 = vmatprep.subr.mxu0 0.0
  %390 = vmatpush2.msra.mxu0 0.0
  %391 = vmatprep.subr.mxu0 0.0
  %392 = vmatpush2.msra.mxu0 0.0
  %393 = vmatprep.subr.mxu0 0.0
  %394 = vmatpush2.msra.mxu0 0.0
  %395 = vmatprep.subr.mxu0 0.0
  %396 = vmatpush2.msra.mxu0 0.0
  %397 = vmatprep.subr.mxu0 0.0
  %398 = vmatpush2.msra.mxu0 0.0
  %399 = vmatprep.subr.mxu0 0.0
  %400 = vmatpush2.msra.mxu0 0.0
  %401 = vmatprep.subr.mxu0 0.0
  %402 = vmatpush2.msra.mxu0 0.0
  %403 = vmatprep.subr.mxu0 0.0
  %404 = vmatpush2.msra.mxu0 0.0
  %405 = vmatprep.subr.mxu0 0.0
  %406 = vmatpush2.msra.mxu0 0.0
  %407 = vmatprep.subr.mxu0 0.0
  %408 = vmatpush2.msra.mxu0 0.0
  %409 = vmatprep.subr.mxu0 0.0
  %410 = vmatpush2.msra.mxu0 0.0
  %411 = vmatprep.mubr.f32.mxu0 0.0
  %412 = vmatmul.mubr.f32.gmra.mxu0 %v345
  %v413 = vpop.f32.mrf.mxu0
  %v414 = vadd.f32 %v342, %v413
  %v415 = vpop.f32.mrf.mxu0
  %416 = vdwg.mxu0
  %v417 = vlaneseq
  %v418 = vand.u32 %v417, 127
  %vm419 = vcmp.lt.s32.totalorder %v418, 4
  %v420 = vsel %vm419, %v414, -1e+30
  %421 = vmax.xlane.f32.xlu0 %v420
  %v422 = vpop.xlane.xlu0 %421
  %v423 = vsub.f32 %v420, %v422
  %v424 = vmul.f32 %v423, 1.442695
  %v425 = vpow.pop %v424
  %426 = vadd.xlane.f32.xlu0 %v425
  %v427 = vpop.xlane.xlu0 %426
  %v428 = vlog2.pop %v427
  %v429 = vmul.f32 %v428, 0.6931472
  %v430 = vadd.f32 %v422, %v429
  %v431 = vsub.f32 %v420, %v430
  %432 = vst [vmem:[%s6] sm:$0xff] %v431
  // Predicated region
  $region26: #{net_forward.3} parent=0 // pred_check
    _
  $region27: #{net_forward.3} parent=0 // pred_check_branch
    %434 = sbr.rel (0) target = $region29
  $region28: #{net_forward.3} parent=0 // pred_region
    _
  $region29: #{net_forward.3} parent=0 // pred_fallthru
    _
  // Predicated region
  $region30: #{net_forward.3} parent=0 // pred_check
    _
  $region31: #{net_forward.3} parent=0 // pred_check_branch
    %436 = sbr.rel (0) target = $region33
  $region32: #{net_forward.3} parent=0 // pred_region
    _
  $region33: #{net_forward.3} parent=0 // pred_fallthru
    _

// kernel: net_forward.2
$region0: #{net_forward.2}
  #allocation0 [shape = 'u32[]', space=smem, size = 0x4, offset = 0x4, fixed_abs, tag = 'smem constant byte address 0x4 - core index']
  #allocation1 [shape = 'u32[144,128]{1,0:T(1,128)}', space=vmem, size = 0x12000, scoped, tag = 'internal scratch']
  %s0 = inlined_call_operand.vmem [shape: f32[8,16], index: 0, kind: input, shape index: {}]
  %s1 = inlined_call_operand.vmem [shape: f32[16,64], index: 1, kind: input, shape index: {}]
  %s2 = inlined_call_operand.vmem [shape: f32[64,8], index: 2, kind: input, shape index: {}]
  %s3 = inlined_call_operand.vmem [shape: f32[64,8], index: 3, kind: input, shape index: {}]
  %s4 = inlined_call_operand.vmem [shape: f32[1,64], index: 4, kind: input, shape index: {}]
  %s5 = inlined_call_operand.vmem [shape: f32[8,8], index: 5, kind: input, shape index: {}]
  %s6 = inlined_call_operand.vmem [shape: f32[8,64], index: 6, kind: output, shape index: {}]
  %s7 = sld [smem:[#allocation0]]
  $region34: #{net_forward.2} parent=0
    _
  %s9 = ssub.s32 1, %s7
  %s10 = scalar_select 0, %s9, %s7
  // Predicated region
  $region2: #{net_forward.2} parent=0 // pred_check
    _
  $region3: #{net_forward.2} parent=0 // pred_check_branch
    %12 = sbr.rel (0) target = $region5
  $region4: #{net_forward.2} parent=0 // pred_region
    _
  $region5: #{net_forward.2} parent=0 // pred_fallthru
    _
  // Predicated region
  $region6: #{net_forward.2} parent=0 // pred_check
    _
  $region7: #{net_forward.2} parent=0 // pred_check_branch
    %14 = sbr.rel (0) target = $region9
  $region8: #{net_forward.2} parent=0 // pred_region
    _
  $region9: #{net_forward.2} parent=0 // pred_fallthru
    _
  // Predicated region
  $region10: #{net_forward.2} parent=0 // pred_check
    _
  $region11: #{net_forward.2} parent=0 // pred_check_branch
    %16 = sbr.rel (0) target = $region13
  $region12: #{net_forward.2} parent=0 // pred_region
    _
  $region13: #{net_forward.2} parent=0 // pred_fallthru
    _
  // Predicated region
  $region14: #{net_forward.2} parent=0 // pred_check
    _
  $region15: #{net_forward.2} parent=0 // pred_check_branch
    %18 = sbr.rel (0) target = $region17
  $region16: #{net_forward.2} parent=0 // pred_region
    _
  $region17: #{net_forward.2} parent=0 // pred_fallthru
    _
  // Predicated region
  $region18: #{net_forward.2} parent=0 // pred_check
    _
  $region19: #{net_forward.2} parent=0 // pred_check_branch
    %20 = sbr.rel (0) target = $region21
  $region20: #{net_forward.2} parent=0 // pred_region
    _
  $region21: #{net_forward.2} parent=0 // pred_fallthru
    _
  // Predicated region
  $region22: #{net_forward.2} parent=0 // pred_check
    _
  $region23: #{net_forward.2} parent=0 // pred_check_branch
    %22 = sbr.rel (0) target = $region25
  $region24: #{net_forward.2} parent=0 // pred_region
    _
  $region25: #{net_forward.2} parent=0 // pred_fallthru
    _
  %v23 = vld [vmem:[%s0] sm:$0xff]
  %v24 = vld [vmem:[%s1] sm:$0xff]
  %v25 = vld [vmem:[%s1 + $0x8] sm:$0xff]
  %vm26 = vcmask 130048
  %v28 = vsel %vm26, %v23, 0
  %30 = vmatprep.subr.mxu0 0.0
  %31 = vmatpush1.msra.mxu0 0.0
  %32 = vmatprep.subr.mxu0 0.0
  %33 = vmatpush1.msra.mxu0 0.0
  %34 = vmatprep.subr.mxu0 0.0
  %35 = vmatpush1.msra.mxu0 0.0
  %36 = vmatprep.subr.mxu0 0.0
  %37 = vmatpush1.msra.mxu0 0.0
  %38 = vmatprep.subr.mxu0 0.0
  %39 = vmatpush1.msra.mxu0 0.0
  %40 = vmatprep.subr.mxu0 0.0
  %41 = vmatpush1.msra.mxu0 0.0
  %42 = vmatprep.subr.mxu0 0.0
  %43 = vmatpush1.msra.mxu0 0.0
  %44 = vmatprep.subr.mxu0 0.0
  %45 = vmatpush1.msra.mxu0 0.0
  %46 = vmatprep.subr.mxu0 0.0
  %47 = vmatpush1.msra.mxu0 0.0
  %48 = vmatprep.subr.mxu0 0.0
  %49 = vmatpush1.msra.mxu0 0.0
  %50 = vmatprep.subr.mxu0 0.0
  %51 = vmatpush1.msra.mxu0 0.0
  %52 = vmatprep.subr.mxu0 0.0
  %53 = vmatpush1.msra.mxu0 0.0
  %54 = vmatprep.subr.mxu0 0.0
  %55 = vmatpush1.msra.mxu0 0.0
  %56 = vmatprep.subr.mxu0 0.0
  %57 = vmatpush1.msra.mxu0 0.0
  %58 = vmatprep.subr.mxu0 0.0
  %59 = vmatpush1.msra.mxu0 %v25
  %60 = vmatprep.subr.mxu0 0.0
  %61 = vmatpush1.msra.mxu0 %v24
  %62 = vmatprep.subr.mxu0 0.0
  %63 = vmatpush2.msra.mxu0 0.0
  %64 = vmatprep.subr.mxu0 0.0
  %65 = vmatpush2.msra.mxu0 0.0
  %66 = vmatprep.subr.mxu0 0.0
  %67 = vmatpush2.msra.mxu0 0.0
  %68 = vmatprep.subr.mxu0 0.0
  %69 = vmatpush2.msra.mxu0 0.0
  %70 = vmatprep.subr.mxu0 0.0
  %71 = vmatpush2.msra.mxu0 0.0
  %72 = vmatprep.subr.mxu0 0.0
  %73 = vmatpush2.msra.mxu0 0.0
  %74 = vmatprep.subr.mxu0 0.0
  %75 = vmatpush2.msra.mxu0 0.0
  %76 = vmatprep.subr.mxu0 0.0
  %77 = vmatpush2.msra.mxu0 0.0
  %78 = vmatprep.subr.mxu0 0.0
  %79 = vmatpush2.msra.mxu0 0.0
  %80 = vmatprep.subr.mxu0 0.0
  %81 = vmatpush2.msra.mxu0 0.0
  %82 = vmatprep.subr.mxu0 0.0
  %83 = vmatpush2.msra.mxu0 0.0
  %84 = vmatprep.subr.mxu0 0.0
  %85 = vmatpush2.msra.mxu0 0.0
  %86 = vmatprep.subr.mxu0 0.0
  %87 = vmatpush2.msra.mxu0 0.0
  %88 = vmatprep.subr.mxu0 0.0
  %89 = vmatpush2.msra.mxu0 0.0
  %90 = vmatprep.subr.mxu0 0.0
  %91 = vmatpush2.msra.mxu0 0.0
  %92 = vmatprep.subr.mxu0 0.0
  %93 = vmatpush2.msra.mxu0 0.0
  %94 = vmatprep.mubr.f32.mxu0 0.0
  %95 = vmatmul.mubr.f32.gmra.mxu0 %v28
  %v96 = vpop.f32.mrf.mxu0
  %v97 = vadd.f32 0.0, %v96
  %v98 = vpop.f32.mrf.mxu0
  %99 = vdwg.mxu0
  %v100 = vld [vmem:[%s2] sm:$0xff]
  %v101 = vld [vmem:[%s2 + $0x8] sm:$0xff]
  %v102 = vld [vmem:[%s2 + $0x10] sm:$0xff]
  %v103 = vld [vmem:[%s2 + $0x18] sm:$0xff]
  %v104 = vld [vmem:[%s2 + $0x20] sm:$0xff]
  %v105 = vld [vmem:[%s2 + $0x28] sm:$0xff]
  %v106 = vld [vmem:[%s2 + $0x30] sm:$0xff]
  %v107 = vld [vmem:[%s2 + $0x38] sm:$0xff]
  %vm108 = vcmask 523264
  %v110 = vsel %vm108, %v97, 0
  %112 = vmatprep.subr.mxu0 0.0
  %113 = vmatpush1.msra.mxu0 0.0
  %114 = vmatprep.subr.mxu0 0.0
  %115 = vmatpush1.msra.mxu0 0.0
  %116 = vmatprep.subr.mxu0 0.0
  %117 = vmatpush1.msra.mxu0 0.0
  %118 = vmatprep.subr.mxu0 0.0
  %119 = vmatpush1.msra.mxu0 0.0
  %120 = vmatprep.subr.mxu0 0.0
  %121 = vmatpush1.msra.mxu0 0.0
  %122 = vmatprep.subr.mxu0 0.0
  %123 = vmatpush1.msra.mxu0 0.0
  %124 = vmatprep.subr.mxu0 0.0
  %125 = vmatpush1.msra.mxu0 0.0
  %126 = vmatprep.subr.mxu0 0.0
  %127 = vmatpush1.msra.mxu0 0.0
  %128 = vmatprep.subr.mxu0 0.0
  %129 = vmatpush1.msra.mxu0 %v107
  %130 = vmatprep.subr.mxu0 0.0
  %131 = vmatpush1.msra.mxu0 %v106
  %132 = vmatprep.subr.mxu0 0.0
  %133 = vmatpush1.msra.mxu0 %v105
  %134 = vmatprep.subr.mxu0 0.0
  %135 = vmatpush1.msra.mxu0 %v104
  %136 = vmatprep.subr.mxu0 0.0
  %137 = vmatpush1.msra.mxu0 %v103
  %138 = vmatprep.subr.mxu0 0.0
  %139 = vmatpush1.msra.mxu0 %v102
  %140 = vmatprep.subr.mxu0 0.0
  %141 = vmatpush1.msra.mxu0 %v101
  %142 = vmatprep.subr.mxu0 0.0
  %143 = vmatpush1.msra.mxu0 %v100
  %144 = vmatprep.subr.mxu0 0.0
  %145 = vmatpush2.msra.mxu0 0.0
  %146 = vmatprep.subr.mxu0 0.0
  %147 = vmatpush2.msra.mxu0 0.0
  %148 = vmatprep.subr.mxu0 0.0
  %149 = vmatpush2.msra.mxu0 0.0
  %150 = vmatprep.subr.mxu0 0.0
  %151 = vmatpush2.msra.mxu0 0.0
  %152 = vmatprep.subr.mxu0 0.0
  %153 = vmatpush2.msra.mxu0 0.0
  %154 = vmatprep.subr.mxu0 0.0
  %155 = vmatpush2.msra.mxu0 0.0
  %156 = vmatprep.subr.mxu0 0.0
  %157 = vmatpush2.msra.mxu0 0.0
  %158 = vmatprep.subr.mxu0 0.0
  %159 = vmatpush2.msra.mxu0 0.0
  %160 = vmatprep.subr.mxu0 0.0
  %161 = vmatpush2.msra.mxu0 0.0
  %162 = vmatprep.subr.mxu0 0.0
  %163 = vmatpush2.msra.mxu0 0.0
  %164 = vmatprep.subr.mxu0 0.0
  %165 = vmatpush2.msra.mxu0 0.0
  %166 = vmatprep.subr.mxu0 0.0
  %167 = vmatpush2.msra.mxu0 0.0
  %168 = vmatprep.subr.mxu0 0.0
  %169 = vmatpush2.msra.mxu0 0.0
  %170 = vmatprep.subr.mxu0 0.0
  %171 = vmatpush2.msra.mxu0 0.0
  %172 = vmatprep.subr.mxu0 0.0
  %173 = vmatpush2.msra.mxu0 0.0
  %174 = vmatprep.subr.mxu0 0.0
  %175 = vmatpush2.msra.mxu0 0.0
  %176 = vmatprep.mubr.f32.mxu0 0.0
  %177 = vmatmul.mubr.f32.gmra.mxu0 %v110
  %v178 = vpop.f32.mrf.mxu0
  %v179 = vadd.f32 0.0, %v178
  %v180 = vpop.f32.mrf.mxu0
  %181 = vdwg.mxu0
  %182 = vxpose.xlu0.b32.start [1/16] %v179, 128
  %183 = vxpose.xlu0.b32.cont [2/16] 0.0, 128
  %184 = vxpose.xlu0.b32.cont [3/16] 0.0, 128
  %185 = vxpose.xlu0.b32.cont [4/16] 0.0, 128
  %186 = vxpose.xlu0.b32.cont [5/16] 0.0, 128
  %187 = vxpose.xlu0.b32.cont [6/16] 0.0, 128
  %188 = vxpose.xlu0.b32.cont [7/16] 0.0, 128
  %189 = vxpose.xlu0.b32.cont [8/16] 0.0, 128
  %190 = vxpose.xlu0.b32.cont [9/16] 0.0, 128
  %191 = vxpose.xlu0.b32.cont [10/16] 0.0, 128
  %192 = vxpose.xlu0.b32.cont [11/16] 0.0, 128
  %193 = vxpose.xlu0.b32.cont [12/16] 0.0, 128
  %194 = vxpose.xlu0.b32.cont [13/16] 0.0, 128
  %195 = vxpose.xlu0.b32.cont [14/16] 0.0, 128
  %196 = vxpose.xlu0.b32.cont [15/16] 0.0, 128
  %197 = vxpose.xlu0.b32.end [16/16] 0.0, 128
  %v198 = vpop.trf.xlu0
  %v199 = vpop.trf.xlu0
  %v200 = vpop.trf.xlu0
  %v201 = vpop.trf.xlu0
  %v202 = vpop.trf.xlu0
  %v203 = vpop.trf.xlu0
  %v204 = vpop.trf.xlu0
  %v205 = vpop.trf.xlu0
  %v206 = vpop.trf.xlu0
  %v207 = vpop.trf.xlu0
  %v208 = vpop.trf.xlu0
  %v209 = vpop.trf.xlu0
  %v210 = vpop.trf.xlu0
  %v211 = vpop.trf.xlu0
  %v212 = vpop.trf.xlu0
  %v213 = vpop.trf.xlu0
  %v214 = vld [vmem:[%s3] sm:$0xff]
  %v215 = vld [vmem:[%s3 + $0x8] sm:$0xff]
  %v216 = vld [vmem:[%s3 + $0x10] sm:$0xff]
  %v217 = vld [vmem:[%s3 + $0x18] sm:$0xff]
  %v218 = vld [vmem:[%s3 + $0x20] sm:$0xff]
  %v219 = vld [vmem:[%s3 + $0x28] sm:$0xff]
  %v220 = vld [vmem:[%s3 + $0x30] sm:$0xff]
  %v221 = vld [vmem:[%s3 + $0x38] sm:$0xff]
  %222 = vmatprep.subr.mxu0 0.0
  %223 = vmatpush1.msra.mxu0 0.0
  %224 = vmatprep.subr.mxu0 0.0
  %225 = vmatpush1.msra.mxu0 0.0
  %226 = vmatprep.subr.mxu0 0.0
  %227 = vmatpush1.msra.mxu0 0.0
  %228 = vmatprep.subr.mxu0 0.0
  %229 = vmatpush1.msra.mxu0 0.0
  %230 = vmatprep.subr.mxu0 0.0
  %231 = vmatpush1.msra.mxu0 0.0
  %232 = vmatprep.subr.mxu0 0.0
  %233 = vmatpush1.msra.mxu0 0.0
  %234 = vmatprep.subr.mxu0 0.0
  %235 = vmatpush1.msra.mxu0 0.0
  %236 = vmatprep.subr.mxu0 0.0
  %237 = vmatpush1.msra.mxu0 0.0
  %238 = vmatprep.subr.mxu0 0.0
  %239 = vmatpush1.msra.mxu0 %v221
  %240 = vmatprep.subr.mxu0 0.0
  %241 = vmatpush1.msra.mxu0 %v220
  %242 = vmatprep.subr.mxu0 0.0
  %243 = vmatpush1.msra.mxu0 %v219
  %244 = vmatprep.subr.mxu0 0.0
  %245 = vmatpush1.msra.mxu0 %v218
  %246 = vmatprep.subr.mxu0 0.0
  %247 = vmatpush1.msra.mxu0 %v217
  %248 = vmatprep.subr.mxu0 0.0
  %249 = vmatpush1.msra.mxu0 %v216
  %250 = vmatprep.subr.mxu0 0.0
  %251 = vmatpush1.msra.mxu0 %v215
  %252 = vmatprep.subr.mxu0 0.0
  %253 = vmatpush1.msra.mxu0 %v214
  %254 = vmatprep.subr.mxu0 0.0
  %255 = vmatpush2.msra.mxu0 0.0
  %256 = vmatprep.subr.mxu0 0.0
  %257 = vmatpush2.msra.mxu0 0.0
  %258 = vmatprep.subr.mxu0 0.0
  %259 = vmatpush2.msra.mxu0 0.0
  %260 = vmatprep.subr.mxu0 0.0
  %261 = vmatpush2.msra.mxu0 0.0
  %262 = vmatprep.subr.mxu0 0.0
  %263 = vmatpush2.msra.mxu0 0.0
  %264 = vmatprep.subr.mxu0 0.0
  %265 = vmatpush2.msra.mxu0 0.0
  %266 = vmatprep.subr.mxu0 0.0
  %267 = vmatpush2.msra.mxu0 0.0
  %268 = vmatprep.subr.mxu0 0.0
  %269 = vmatpush2.msra.mxu0 0.0
  %270 = vmatprep.subr.mxu0 0.0
  %271 = vmatpush2.msra.mxu0 0.0
  %272 = vmatprep.subr.mxu0 0.0
  %273 = vmatpush2.msra.mxu0 0.0
  %274 = vmatprep.subr.mxu0 0.0
  %275 = vmatpush2.msra.mxu0 0.0
  %276 = vmatprep.subr.mxu0 0.0
  %277 = vmatpush2.msra.mxu0 0.0
  %278 = vmatprep.subr.mxu0 0.0
  %279 = vmatpush2.msra.mxu0 0.0
  %280 = vmatprep.subr.mxu0 0.0
  %281 = vmatpush2.msra.mxu0 0.0
  %282 = vmatprep.subr.mxu0 0.0
  %283 = vmatpush2.msra.mxu0 0.0
  %284 = vmatprep.subr.mxu0 0.0
  %285 = vmatpush2.msra.mxu0 0.0
  %286 = vmatprep.mubr.f32.mxu0 0.0
  %287 = vmatmul.mubr.f32.gmra.mxu0 %v110
  %v288 = vpop.f32.mrf.mxu0
  %v289 = vadd.f32 0.0, %v288
  %v290 = vpop.f32.mrf.mxu0
  %291 = vdwg.mxu0
  %v292 = vld [vmem:[%s5] sm:$0xff]
  %294 = vset.pattern.permute.xlu0 0
  %295 = vperm.xlu0 %294, %v289
  %v296 = vpop.permute.xlu0 %295
  %v298 = vlaneseq
  %v299 = vshrl.u32 %v298, 7
  %v300 = vsub.s32 0, %v299
  %v301 = vrot.slane %v198, %v300
  %v302 = vadd.f32 %v296, %v301
  %vm303 = vcmp.gt.f32.partialorder %v302, 0.0
  %v304 = vmul.f32 %v302, 0.2
  %v305 = vsel %vm303, %v302, %v304
  %v306 = vadd.f32 %v305, %v292
  %vm307 = vcmask 64512
  %v308 = vsel %vm307, %v306, -inf
  %309 = vmax.xlane.f32.xlu0 %v308
  %v310 = vpop.xlane.xlu0 %309
  %v311 = vsub.f32 %v306, %v310
  %v312 = vmul.f32 %v311, 1.442695
  %v313 = vpow.pop %v312
  %v314 = vsel %vm307, %v313, 0.0
  %315 = vadd.xlane.f32.xlu0 %v314
  %v316 = vpop.xlane.xlu0 %315
  %v317 = vrcp.pop %v316
  %v318 = vmul.f32 %v313, %v317
  %v320 = vsel %vm307, %v318, 0
  %322 = vmatprep.subr.mxu0 0.0
  %323 = vmatpush1.msra.mxu0 0.0
  %324 = vmatprep.subr.mxu0 0.0
  %325 = vmatpush1.msra.mxu0 0.0
  %326 = vmatprep.subr.mxu0 0.0
  %327 = vmatpush1.msra.mxu0 0.0
  %328 = vmatprep.subr.mxu0 0.0
  %329 = vmatpush1.msra.mxu0 0.0
  %330 = vmatprep.subr.mxu0 0.0
  %331 = vmatpush1.msra.mxu0 0.0
  %332 = vmatprep.subr.mxu0 0.0
  %333 = vmatpush1.msra.mxu0 0.0
  %334 = vmatprep.subr.mxu0 0.0
  %335 = vmatpush1.msra.mxu0 0.0
  %336 = vmatprep.subr.mxu0 0.0
  %337 = vmatpush1.msra.mxu0 0.0
  %338 = vmatprep.subr.mxu0 0.0
  %339 = vmatpush1.msra.mxu0 0.0
  %340 = vmatprep.subr.mxu0 0.0
  %341 = vmatpush1.msra.mxu0 0.0
  %342 = vmatprep.subr.mxu0 0.0
  %343 = vmatpush1.msra.mxu0 0.0
  %344 = vmatprep.subr.mxu0 0.0
  %345 = vmatpush1.msra.mxu0 0.0
  %346 = vmatprep.subr.mxu0 0.0
  %347 = vmatpush1.msra.mxu0 0.0
  %348 = vmatprep.subr.mxu0 0.0
  %349 = vmatpush1.msra.mxu0 0.0
  %350 = vmatprep.subr.mxu0 0.0
  %351 = vmatpush1.msra.mxu0 0.0
  %352 = vmatprep.subr.mxu0 0.0
  %353 = vmatpush1.msra.mxu0 %v97
  %354 = vmatprep.subr.mxu0 0.0
  %355 = vmatpush2.msra.mxu0 0.0
  %356 = vmatprep.subr.mxu0 0.0
  %357 = vmatpush2.msra.mxu0 0.0
  %358 = vmatprep.subr.mxu0 0.0
  %359 = vmatpush2.msra.mxu0 0.0
  %360 = vmatprep.subr.mxu0 0.0
  %361 = vmatpush2.msra.mxu0 0.0
  %362 = vmatprep.subr.mxu0 0.0
  %363 = vmatpush2.msra.mxu0 0.0
  %364 = vmatprep.subr.mxu0 0.0
  %365 = vmatpush2.msra.mxu0 0.0
  %366 = vmatprep.subr.mxu0 0.0
  %367 = vmatpush2.msra.mxu0 0.0
  %368 = vmatprep.subr.mxu0 0.0
  %369 = vmatpush2.msra.mxu0 0.0
  %370 = vmatprep.subr.mxu0 0.0
  %371 = vmatpush2.msra.mxu0 0.0
  %372 = vmatprep.subr.mxu0 0.0
  %373 = vmatpush2.msra.mxu0 0.0
  %374 = vmatprep.subr.mxu0 0.0
  %375 = vmatpush2.msra.mxu0 0.0
  %376 = vmatprep.subr.mxu0 0.0
  %377 = vmatpush2.msra.mxu0 0.0
  %378 = vmatprep.subr.mxu0 0.0
  %379 = vmatpush2.msra.mxu0 0.0
  %380 = vmatprep.subr.mxu0 0.0
  %381 = vmatpush2.msra.mxu0 0.0
  %382 = vmatprep.subr.mxu0 0.0
  %383 = vmatpush2.msra.mxu0 0.0
  %384 = vmatprep.subr.mxu0 0.0
  %385 = vmatpush2.msra.mxu0 0.0
  %386 = vmatprep.mubr.f32.mxu0 0.0
  %387 = vmatmul.mubr.f32.gmra.mxu0 %v320
  %v388 = vpop.f32.mrf.mxu0
  %v389 = vadd.f32 0.0, %v388
  %v390 = vpop.f32.mrf.mxu0
  %391 = vdwg.mxu0
  %392 = vset.pattern.permute.xlu0 1
  %393 = vperm.xlu0 %392, %v289
  %v394 = vpop.permute.xlu0 %393
  %v396 = vlaneseq
  %v397 = vshrl.u32 %v396, 7
  %v398 = vsub.s32 1, %v397
  %v399 = vrot.slane %v198, %v398
  %v400 = vadd.f32 %v394, %v399
  %vm401 = vcmp.gt.f32.partialorder %v400, 0.0
  %v402 = vmul.f32 %v400, 0.2
  %v403 = vsel %vm401, %v400, %v402
  %v404 = vadd.f32 %v403, %v292
  %v405 = vsel %vm307, %v404, -inf
  %406 = vmax.xlane.f32.xlu0 %v405
  %v407 = vpop.xlane.xlu0 %406
  %v408 = vsub.f32 %v404, %v407
  %v409 = vmul.f32 %v408, 1.442695
  %v410 = vpow.pop %v409
  %v411 = vsel %vm307, %v410, 0.0
  %412 = vadd.xlane.f32.xlu0 %v411
  %v413 = vpop.xlane.xlu0 %412
  %v414 = vrcp.pop %v413
  %v415 = vmul.f32 %v410, %v414
  %416 = vrot.lane.b32.xlu0 %v97, 120
  %v417 = vpop.permute.xlu0 %416
  %v420 = vsel %vm307, %v415, 0
  %422 = vmatprep.subr.mxu0 0.0
  %423 = vmatpush1.msra.mxu0 0.0
  %424 = vmatprep.subr.mxu0 0.0
  %425 = vmatpush1.msra.mxu0 0.0
  %426 = vmatprep.subr.mxu0 0.0
  %427 = vmatpush1.msra.mxu0 0.0
  %428 = vmatprep.subr.mxu0 0.0
  %429 = vmatpush1.msra.mxu0 0.0
  %430 = vmatprep.subr.mxu0 0.0
  %431 = vmatpush1.msra.mxu0 0.0
  %432 = vmatprep.subr.mxu0 0.0
  %433 = vmatpush1.msra.mxu0 0.0
  %434 = vmatprep.subr.mxu0 0.0
  %435 = vmatpush1.msra.mxu0 0.0
  %436 = vmatprep.subr.mxu0 0.0
  %437 = vmatpush1.msra.mxu0 0.0
  %438 = vmatprep.subr.mxu0 0.0
  %439 = vmatpush1.msra.mxu0 0.0
  %440 = vmatprep.subr.mxu0 0.0
  %441 = vmatpush1.msra.mxu0 0.0
  %442 = vmatprep.subr.mxu0 0.0
  %443 = vmatpush1.msra.mxu0 0.0
  %444 = vmatprep.subr.mxu0 0.0
  %445 = vmatpush1.msra.mxu0 0.0
  %446 = vmatprep.subr.mxu0 0.0
  %447 = vmatpush1.msra.mxu0 0.0
  %448 = vmatprep.subr.mxu0 0.0
  %449 = vmatpush1.msra.mxu0 0.0
  %450 = vmatprep.subr.mxu0 0.0
  %451 = vmatpush1.msra.mxu0 0.0
  %452 = vmatprep.subr.mxu0 0.0
  %453 = vmatpush1.msra.mxu0 %v417
  %454 = vmatprep.subr.mxu0 0.0
  %455 = vmatpush2.msra.mxu0 0.0
  %456 = vmatprep.subr.mxu0 0.0
  %457 = vmatpush2.msra.mxu0 0.0
  %458 = vmatprep.subr.mxu0 0.0
  %459 = vmatpush2.msra.mxu0 0.0
  %460 = vmatprep.subr.mxu0 0.0
  %461 = vmatpush2.msra.mxu0 0.0
  %462 = vmatprep.subr.mxu0 0.0
  %463 = vmatpush2.msra.mxu0 0.0
  %464 = vmatprep.subr.mxu0 0.0
  %465 = vmatpush2.msra.mxu0 0.0
  %466 = vmatprep.subr.mxu0 0.0
  %467 = vmatpush2.msra.mxu0 0.0
  %468 = vmatprep.subr.mxu0 0.0
  %469 = vmatpush2.msra.mxu0 0.0
  %470 = vmatprep.subr.mxu0 0.0
  %471 = vmatpush2.msra.mxu0 0.0
  %472 = vmatprep.subr.mxu0 0.0
  %473 = vmatpush2.msra.mxu0 0.0
  %474 = vmatprep.subr.mxu0 0.0
  %475 = vmatpush2.msra.mxu0 0.0
  %476 = vmatprep.subr.mxu0 0.0
  %477 = vmatpush2.msra.mxu0 0.0
  %478 = vmatprep.subr.mxu0 0.0
  %479 = vmatpush2.msra.mxu0 0.0
  %480 = vmatprep.subr.mxu0 0.0
  %481 = vmatpush2.msra.mxu0 0.0
  %482 = vmatprep.subr.mxu0 0.0
  %483 = vmatpush2.msra.mxu0 0.0
  %484 = vmatprep.subr.mxu0 0.0
  %485 = vmatpush2.msra.mxu0 0.0
  %486 = vmatprep.mubr.f32.mxu0 0.0
  %487 = vmatmul.mubr.f32.gmra.mxu0 %v420
  %v488 = vpop.f32.mrf.mxu0
  %v489 = vadd.f32 0.0, %v488
  %v490 = vpop.f32.mrf.mxu0
  %491 = vdwg.mxu0
  %492 = vset.pattern.permute.xlu0 2
  %493 = vperm.xlu0 %492, %v289
  %v494 = vpop.permute.xlu0 %493
  %v496 = vlaneseq
  %v497 = vshrl.u32 %v496, 7
  %v498 = vsub.s32 2, %v497
  %v499 = vrot.slane %v198, %v498
  %v500 = vadd.f32 %v494, %v499
  %vm501 = vcmp.gt.f32.partialorder %v500, 0.0
  %v502 = vmul.f32 %v500, 0.2
  %v503 = vsel %vm501, %v500, %v502
  %v504 = vadd.f32 %v503, %v292
  %v505 = vsel %vm307, %v504, -inf
  %506 = vmax.xlane.f32.xlu0 %v505
  %v507 = vpop.xlane.xlu0 %506
  %v508 = vsub.f32 %v504, %v507
  %v509 = vmul.f32 %v508, 1.442695
  %v510 = vpow.pop %v509
  %v511 = vsel %vm307, %v510, 0.0
  %512 = vadd.xlane.f32.xlu0 %v511
  %v513 = vpop.xlane.xlu0 %512
  %v514 = vrcp.pop %v513
  %v515 = vmul.f32 %v510, %v514
  %516 = vrot.lane.b32.xlu0 %v97, 112
  %v517 = vpop.permute.xlu0 %516
  %v520 = vsel %vm307, %v515, 0
  %522 = vmatprep.subr.mxu0 0.0
  %523 = vmatpush1.msra.mxu0 0.0
  %524 = vmatprep.subr.mxu0 0.0
  %525 = vmatpush1.msra.mxu0 0.0
  %526 = vmatprep.subr.mxu0 0.0
  %527 = vmatpush1.msra.mxu0 0.0
  %528 = vmatprep.subr.mxu0 0.0
  %529 = vmatpush1.msra.mxu0 0.0
  %530 = vmatprep.subr.mxu0 0.0
  %531 = vmatpush1.msra.mxu0 0.0
  %532 = vmatprep.subr.mxu0 0.0
  %533 = vmatpush1.msra.mxu0 0.0
  %534 = vmatprep.subr.mxu0 0.0
  %535 = vmatpush1.msra.mxu0 0.0
  %536 = vmatprep.subr.mxu0 0.0
  %537 = vmatpush1.msra.mxu0 0.0
  %538 = vmatprep.subr.mxu0 0.0
  %539 = vmatpush1.msra.mxu0 0.0
  %540 = vmatprep.subr.mxu0 0.0
  %541 = vmatpush1.msra.mxu0 0.0
  %542 = vmatprep.subr.mxu0 0.0
  %543 = vmatpush1.msra.mxu0 0.0
  %544 = vmatprep.subr.mxu0 0.0
  %545 = vmatpush1.msra.mxu0 0.0
  %546 = vmatprep.subr.mxu0 0.0
  %547 = vmatpush1.msra.mxu0 0.0
  %548 = vmatprep.subr.mxu0 0.0
  %549 = vmatpush1.msra.mxu0 0.0
  %550 = vmatprep.subr.mxu0 0.0
  %551 = vmatpush1.msra.mxu0 0.0
  %552 = vmatprep.subr.mxu0 0.0
  %553 = vmatpush1.msra.mxu0 %v517
  %554 = vmatprep.subr.mxu0 0.0
  %555 = vmatpush2.msra.mxu0 0.0
  %556 = vmatprep.subr.mxu0 0.0
  %557 = vmatpush2.msra.mxu0 0.0
  %558 = vmatprep.subr.mxu0 0.0
  %559 = vmatpush2.msra.mxu0 0.0
  %560 = vmatprep.subr.mxu0 0.0
  %561 = vmatpush2.msra.mxu0 0.0
  %562 = vmatprep.subr.mxu0 0.0
  %563 = vmatpush2.msra.mxu0 0.0
  %564 = vmatprep.subr.mxu0 0.0
  %565 = vmatpush2.msra.mxu0 0.0
  %566 = vmatprep.subr.mxu0 0.0
  %567 = vmatpush2.msra.mxu0 0.0
  %568 = vmatprep.subr.mxu0 0.0
  %569 = vmatpush2.msra.mxu0 0.0
  %570 = vmatprep.subr.mxu0 0.0
  %571 = vmatpush2.msra.mxu0 0.0
  %572 = vmatprep.subr.mxu0 0.0
  %573 = vmatpush2.msra.mxu0 0.0
  %574 = vmatprep.subr.mxu0 0.0
  %575 = vmatpush2.msra.mxu0 0.0
  %576 = vmatprep.subr.mxu0 0.0
  %577 = vmatpush2.msra.mxu0 0.0
  %578 = vmatprep.subr.mxu0 0.0
  %579 = vmatpush2.msra.mxu0 0.0
  %580 = vmatprep.subr.mxu0 0.0
  %581 = vmatpush2.msra.mxu0 0.0
  %582 = vmatprep.subr.mxu0 0.0
  %583 = vmatpush2.msra.mxu0 0.0
  %584 = vmatprep.subr.mxu0 0.0
  %585 = vmatpush2.msra.mxu0 0.0
  %586 = vmatprep.mubr.f32.mxu0 0.0
  %587 = vmatmul.mubr.f32.gmra.mxu0 %v520
  %v588 = vpop.f32.mrf.mxu0
  %v589 = vadd.f32 0.0, %v588
  %v590 = vpop.f32.mrf.mxu0
  %591 = vdwg.mxu0
  %592 = vset.pattern.permute.xlu0 3
  %593 = vperm.xlu0 %592, %v289
  %v594 = vpop.permute.xlu0 %593
  %v596 = vlaneseq
  %v597 = vshrl.u32 %v596, 7
  %v598 = vsub.s32 3, %v597
  %v599 = vrot.slane %v198, %v598
  %v600 = vadd.f32 %v594, %v599
  %vm601 = vcmp.gt.f32.partialorder %v600, 0.0
  %v602 = vmul.f32 %v600, 0.2
  %v603 = vsel %vm601, %v600, %v602
  %v604 = vadd.f32 %v603, %v292
  %v605 = vsel %vm307, %v604, -inf
  %606 = vmax.xlane.f32.xlu0 %v605
  %v607 = vpop.xlane.xlu0 %606
  %v608 = vsub.f32 %v604, %v607
  %v609 = vmul.f32 %v608, 1.442695
  %v610 = vpow.pop %v609
  %v611 = vsel %vm307, %v610, 0.0
  %612 = vadd.xlane.f32.xlu0 %v611
  %v613 = vpop.xlane.xlu0 %612
  %v614 = vrcp.pop %v613
  %v615 = vmul.f32 %v610, %v614
  %616 = vrot.lane.b32.xlu0 %v97, 104
  %v617 = vpop.permute.xlu0 %616
  %v620 = vsel %vm307, %v615, 0
  %622 = vmatprep.subr.mxu0 0.0
  %623 = vmatpush1.msra.mxu0 0.0
  %624 = vmatprep.subr.mxu0 0.0
  %625 = vmatpush1.msra.mxu0 0.0
  %626 = vmatprep.subr.mxu0 0.0
  %627 = vmatpush1.msra.mxu0 0.0
  %628 = vmatprep.subr.mxu0 0.0
  %629 = vmatpush1.msra.mxu0 0.0
  %630 = vmatprep.subr.mxu0 0.0
  %631 = vmatpush1.msra.mxu0 0.0
  %632 = vmatprep.subr.mxu0 0.0
  %633 = vmatpush1.msra.mxu0 0.0
  %634 = vmatprep.subr.mxu0 0.0
  %635 = vmatpush1.msra.mxu0 0.0
  %636 = vmatprep.subr.mxu0 0.0
  %637 = vmatpush1.msra.mxu0 0.0
  %638 = vmatprep.subr.mxu0 0.0
  %639 = vmatpush1.msra.mxu0 0.0
  %640 = vmatprep.subr.mxu0 0.0
  %641 = vmatpush1.msra.mxu0 0.0
  %642 = vmatprep.subr.mxu0 0.0
  %643 = vmatpush1.msra.mxu0 0.0
  %644 = vmatprep.subr.mxu0 0.0
  %645 = vmatpush1.msra.mxu0 0.0
  %646 = vmatprep.subr.mxu0 0.0
  %647 = vmatpush1.msra.mxu0 0.0
  %648 = vmatprep.subr.mxu0 0.0
  %649 = vmatpush1.msra.mxu0 0.0
  %650 = vmatprep.subr.mxu0 0.0
  %651 = vmatpush1.msra.mxu0 0.0
  %652 = vmatprep.subr.mxu0 0.0
  %653 = vmatpush1.msra.mxu0 %v617
  %654 = vmatprep.subr.mxu0 0.0
  %655 = vmatpush2.msra.mxu0 0.0
  %656 = vmatprep.subr.mxu0 0.0
  %657 = vmatpush2.msra.mxu0 0.0
  %658 = vmatprep.subr.mxu0 0.0
  %659 = vmatpush2.msra.mxu0 0.0
  %660 = vmatprep.subr.mxu0 0.0
  %661 = vmatpush2.msra.mxu0 0.0
  %662 = vmatprep.subr.mxu0 0.0
  %663 = vmatpush2.msra.mxu0 0.0
  %664 = vmatprep.subr.mxu0 0.0
  %665 = vmatpush2.msra.mxu0 0.0
  %666 = vmatprep.subr.mxu0 0.0
  %667 = vmatpush2.msra.mxu0 0.0
  %668 = vmatprep.subr.mxu0 0.0
  %669 = vmatpush2.msra.mxu0 0.0
  %670 = vmatprep.subr.mxu0 0.0
  %671 = vmatpush2.msra.mxu0 0.0
  %672 = vmatprep.subr.mxu0 0.0
  %673 = vmatpush2.msra.mxu0 0.0
  %674 = vmatprep.subr.mxu0 0.0
  %675 = vmatpush2.msra.mxu0 0.0
  %676 = vmatprep.subr.mxu0 0.0
  %677 = vmatpush2.msra.mxu0 0.0
  %678 = vmatprep.subr.mxu0 0.0
  %679 = vmatpush2.msra.mxu0 0.0
  %680 = vmatprep.subr.mxu0 0.0
  %681 = vmatpush2.msra.mxu0 0.0
  %682 = vmatprep.subr.mxu0 0.0
  %683 = vmatpush2.msra.mxu0 0.0
  %684 = vmatprep.subr.mxu0 0.0
  %685 = vmatpush2.msra.mxu0 0.0
  %686 = vmatprep.mubr.f32.mxu0 0.0
  %687 = vmatmul.mubr.f32.gmra.mxu0 %v620
  %v688 = vpop.f32.mrf.mxu0
  %v689 = vadd.f32 0.0, %v688
  %v690 = vpop.f32.mrf.mxu0
  %691 = vdwg.mxu0
  %692 = vset.pattern.permute.xlu0 4
  %693 = vperm.xlu0 %692, %v289
  %v694 = vpop.permute.xlu0 %693
  %v696 = vlaneseq
  %v697 = vshrl.u32 %v696, 7
  %v698 = vsub.s32 4, %v697
  %v699 = vrot.slane %v198, %v698
  %v700 = vadd.f32 %v694, %v699
  %vm701 = vcmp.gt.f32.partialorder %v700, 0.0
  %v702 = vmul.f32 %v700, 0.2
  %v703 = vsel %vm701, %v700, %v702
  %v704 = vadd.f32 %v703, %v292
  %v705 = vsel %vm307, %v704, -inf
  %706 = vmax.xlane.f32.xlu0 %v705
  %v707 = vpop.xlane.xlu0 %706
  %v708 = vsub.f32 %v704, %v707
  %v709 = vmul.f32 %v708, 1.442695
  %v710 = vpow.pop %v709
  %v711 = vsel %vm307, %v710, 0.0
  %712 = vadd.xlane.f32.xlu0 %v711
  %v713 = vpop.xlane.xlu0 %712
  %v714 = vrcp.pop %v713
  %v715 = vmul.f32 %v710, %v714
  %716 = vrot.lane.b32.xlu0 %v97, 96
  %v717 = vpop.permute.xlu0 %716
  %v720 = vsel %vm307, %v715, 0
  %722 = vmatprep.subr.mxu0 0.0
  %723 = vmatpush1.msra.mxu0 0.0
  %724 = vmatprep.subr.mxu0 0.0
  %725 = vmatpush1.msra.mxu0 0.0
  %726 = vmatprep.subr.mxu0 0.0
  %727 = vmatpush1.msra.mxu0 0.0
  %728 = vmatprep.subr.mxu0 0.0
  %729 = vmatpush1.msra.mxu0 0.0
  %730 = vmatprep.subr.mxu0 0.0
  %731 = vmatpush1.msra.mxu0 0.0
  %732 = vmatprep.subr.mxu0 0.0
  %733 = vmatpush1.msra.mxu0 0.0
  %734 = vmatprep.subr.mxu0 0.0
  %735 = vmatpush1.msra.mxu0 0.0
  %736 = vmatprep.subr.mxu0 0.0
  %737 = vmatpush1.msra.mxu0 0.0
  %738 = vmatprep.subr.mxu0 0.0
  %739 = vmatpush1.msra.mxu0 0.0
  %740 = vmatprep.subr.mxu0 0.0
  %741 = vmatpush1.msra.mxu0 0.0
  %742 = vmatprep.subr.mxu0 0.0
  %743 = vmatpush1.msra.mxu0 0.0
  %744 = vmatprep.subr.mxu0 0.0
  %745 = vmatpush1.msra.mxu0 0.0
  %746 = vmatprep.subr.mxu0 0.0
  %747 = vmatpush1.msra.mxu0 0.0
  %748 = vmatprep.subr.mxu0 0.0
  %749 = vmatpush1.msra.mxu0 0.0
  %750 = vmatprep.subr.mxu0 0.0
  %751 = vmatpush1.msra.mxu0 0.0
  %752 = vmatprep.subr.mxu0 0.0
  %753 = vmatpush1.msra.mxu0 %v717
  %754 = vmatprep.subr.mxu0 0.0
  %755 = vmatpush2.msra.mxu0 0.0
  %756 = vmatprep.subr.mxu0 0.0
  %757 = vmatpush2.msra.mxu0 0.0
  %758 = vmatprep.subr.mxu0 0.0
  %759 = vmatpush2.msra.mxu0 0.0
  %760 = vmatprep.subr.mxu0 0.0
  %761 = vmatpush2.msra.mxu0 0.0
  %762 = vmatprep.subr.mxu0 0.0
  %763 = vmatpush2.msra.mxu0 0.0
  %764 = vmatprep.subr.mxu0 0.0
  %765 = vmatpush2.msra.mxu0 0.0
  %766 = vmatprep.subr.mxu0 0.0
  %767 = vmatpush2.msra.mxu0 0.0
  %768 = vmatprep.subr.mxu0 0.0
  %769 = vmatpush2.msra.mxu0 0.0
  %770 = vmatprep.subr.mxu0 0.0
  %771 = vmatpush2.msra.mxu0 0.0
  %772 = vmatprep.subr.mxu0 0.0
  %773 = vmatpush2.msra.mxu0 0.0
  %774 = vmatprep.subr.mxu0 0.0
  %775 = vmatpush2.msra.mxu0 0.0
  %776 = vmatprep.subr.mxu0 0.0
  %777 = vmatpush2.msra.mxu0 0.0
  %778 = vmatprep.subr.mxu0 0.0
  %779 = vmatpush2.msra.mxu0 0.0
  %780 = vmatprep.subr.mxu0 0.0
  %781 = vmatpush2.msra.mxu0 0.0
  %782 = vmatprep.subr.mxu0 0.0
  %783 = vmatpush2.msra.mxu0 0.0
  %784 = vmatprep.subr.mxu0 0.0
  %785 = vmatpush2.msra.mxu0 0.0
  %786 = vmatprep.mubr.f32.mxu0 0.0
  %787 = vmatmul.mubr.f32.gmra.mxu0 %v720
  %v788 = vpop.f32.mrf.mxu0
  %v789 = vadd.f32 0.0, %v788
  %v790 = vpop.f32.mrf.mxu0
  %791 = vdwg.mxu0
  %792 = vset.pattern.permute.xlu0 5
  %793 = vperm.xlu0 %792, %v289
  %v794 = vpop.permute.xlu0 %793
  %v796 = vlaneseq
  %v797 = vshrl.u32 %v796, 7
  %v798 = vsub.s32 5, %v797
  %v799 = vrot.slane %v198, %v798
  %v800 = vadd.f32 %v794, %v799
  %vm801 = vcmp.gt.f32.partialorder %v800, 0.0
  %v802 = vmul.f32 %v800, 0.2
  %v803 = vsel %vm801, %v800, %v802
  %v804 = vadd.f32 %v803, %v292
  %v805 = vsel %vm307, %v804, -inf
  %806 = vmax.xlane.f32.xlu0 %v805
  %v807 = vpop.xlane.xlu0 %806
  %v808 = vsub.f32 %v804, %v807
  %v809 = vmul.f32 %v808, 1.442695
  %v810 = vpow.pop %v809
  %v811 = vsel %vm307, %v810, 0.0
  %812 = vadd.xlane.f32.xlu0 %v811
  %v813 = vpop.xlane.xlu0 %812
  %v814 = vrcp.pop %v813
  %v815 = vmul.f32 %v810, %v814
  %816 = vrot.lane.b32.xlu0 %v97, 88
  %v817 = vpop.permute.xlu0 %816
  %v820 = vsel %vm307, %v815, 0
  %822 = vmatprep.subr.mxu0 0.0
  %823 = vmatpush1.msra.mxu0 0.0
  %824 = vmatprep.subr.mxu0 0.0
  %825 = vmatpush1.msra.mxu0 0.0
  %826 = vmatprep.subr.mxu0 0.0
  %827 = vmatpush1.msra.mxu0 0.0
  %828 = vmatprep.subr.mxu0 0.0
  %829 = vmatpush1.msra.mxu0 0.0
  %830 = vmatprep.subr.mxu0 0.0
  %831 = vmatpush1.msra.mxu0 0.0
  %832 = vmatprep.subr.mxu0 0.0
  %833 = vmatpush1.msra.mxu0 0.0
  %834 = vmatprep.subr.mxu0 0.0
  %835 = vmatpush1.msra.mxu0 0.0
  %836 = vmatprep.subr.mxu0 0.0
  %837 = vmatpush1.msra.mxu0 0.0
  %838 = vmatprep.subr.mxu0 0.0
  %839 = vmatpush1.msra.mxu0 0.0
  %840 = vmatprep.subr.mxu0 0.0
  %841 = vmatpush1.msra.mxu0 0.0
  %842 = vmatprep.subr.mxu0 0.0
  %843 = vmatpush1.msra.mxu0 0.0
  %844 = vmatprep.subr.mxu0 0.0
  %845 = vmatpush1.msra.mxu0 0.0
  %846 = vmatprep.subr.mxu0 0.0
  %847 = vmatpush1.msra.mxu0 0.0
  %848 = vmatprep.subr.mxu0 0.0
  %849 = vmatpush1.msra.mxu0 0.0
  %850 = vmatprep.subr.mxu0 0.0
  %851 = vmatpush1.msra.mxu0 0.0
  %852 = vmatprep.subr.mxu0 0.0
  %853 = vmatpush1.msra.mxu0 %v817
  %854 = vmatprep.subr.mxu0 0.0
  %855 = vmatpush2.msra.mxu0 0.0
  %856 = vmatprep.subr.mxu0 0.0
  %857 = vmatpush2.msra.mxu0 0.0
  %858 = vmatprep.subr.mxu0 0.0
  %859 = vmatpush2.msra.mxu0 0.0
  %860 = vmatprep.subr.mxu0 0.0
  %861 = vmatpush2.msra.mxu0 0.0
  %862 = vmatprep.subr.mxu0 0.0
  %863 = vmatpush2.msra.mxu0 0.0
  %864 = vmatprep.subr.mxu0 0.0
  %865 = vmatpush2.msra.mxu0 0.0
  %866 = vmatprep.subr.mxu0 0.0
  %867 = vmatpush2.msra.mxu0 0.0
  %868 = vmatprep.subr.mxu0 0.0
  %869 = vmatpush2.msra.mxu0 0.0
  %870 = vmatprep.subr.mxu0 0.0
  %871 = vmatpush2.msra.mxu0 0.0
  %872 = vmatprep.subr.mxu0 0.0
  %873 = vmatpush2.msra.mxu0 0.0
  %874 = vmatprep.subr.mxu0 0.0
  %875 = vmatpush2.msra.mxu0 0.0
  %876 = vmatprep.subr.mxu0 0.0
  %877 = vmatpush2.msra.mxu0 0.0
  %878 = vmatprep.subr.mxu0 0.0
  %879 = vmatpush2.msra.mxu0 0.0
  %880 = vmatprep.subr.mxu0 0.0
  %881 = vmatpush2.msra.mxu0 0.0
  %882 = vmatprep.subr.mxu0 0.0
  %883 = vmatpush2.msra.mxu0 0.0
  %884 = vmatprep.subr.mxu0 0.0
  %885 = vmatpush2.msra.mxu0 0.0
  %886 = vmatprep.mubr.f32.mxu0 0.0
  %887 = vmatmul.mubr.f32.gmra.mxu0 %v820
  %v888 = vpop.f32.mrf.mxu0
  %v889 = vadd.f32 0.0, %v888
  %v890 = vpop.f32.mrf.mxu0
  %891 = vdwg.mxu0
  %892 = vset.pattern.permute.xlu0 6
  %893 = vperm.xlu0 %892, %v289
  %v894 = vpop.permute.xlu0 %893
  %v896 = vlaneseq
  %v897 = vshrl.u32 %v896, 7
  %v898 = vsub.s32 6, %v897
  %v899 = vrot.slane %v198, %v898
  %v900 = vadd.f32 %v894, %v899
  %vm901 = vcmp.gt.f32.partialorder %v900, 0.0
  %v902 = vmul.f32 %v900, 0.2
  %v903 = vsel %vm901, %v900, %v902
  %v904 = vadd.f32 %v903, %v292
  %v905 = vsel %vm307, %v904, -inf
  %906 = vmax.xlane.f32.xlu0 %v905
  %v907 = vpop.xlane.xlu0 %906
  %v908 = vsub.f32 %v904, %v907
  %v909 = vmul.f32 %v908, 1.442695
  %v910 = vpow.pop %v909
  %v911 = vsel %vm307, %v910, 0.0
  %912 = vadd.xlane.f32.xlu0 %v911
  %v913 = vpop.xlane.xlu0 %912
  %v914 = vrcp.pop %v913
  %v915 = vmul.f32 %v910, %v914
  %916 = vrot.lane.b32.xlu0 %v97, 80
  %v917 = vpop.permute.xlu0 %916
  %v920 = vsel %vm307, %v915, 0
  %922 = vmatprep.subr.mxu0 0.0
  %923 = vmatpush1.msra.mxu0 0.0
  %924 = vmatprep.subr.mxu0 0.0
  %925 = vmatpush1.msra.mxu0 0.0
  %926 = vmatprep.subr.mxu0 0.0
  %927 = vmatpush1.msra.mxu0 0.0
  %928 = vmatprep.subr.mxu0 0.0
  %929 = vmatpush1.msra.mxu0 0.0
  %930 = vmatprep.subr.mxu0 0.0
  %931 = vmatpush1.msra.mxu0 0.0
  %932 = vmatprep.subr.mxu0 0.0
  %933 = vmatpush1.msra.mxu0 0.0
  %934 = vmatprep.subr.mxu0 0.0
  %935 = vmatpush1.msra.mxu0 0.0
  %936 = vmatprep.subr.mxu0 0.0
  %937 = vmatpush1.msra.mxu0 0.0
  %938 = vmatprep.subr.mxu0 0.0
  %939 = vmatpush1.msra.mxu0 0.0
  %940 = vmatprep.subr.mxu0 0.0
  %941 = vmatpush1.msra.mxu0 0.0
  %942 = vmatprep.subr.mxu0 0.0
  %943 = vmatpush1.msra.mxu0 0.0
  %944 = vmatprep.subr.mxu0 0.0
  %945 = vmatpush1.msra.mxu0 0.0
  %946 = vmatprep.subr.mxu0 0.0
  %947 = vmatpush1.msra.mxu0 0.0
  %948 = vmatprep.subr.mxu0 0.0
  %949 = vmatpush1.msra.mxu0 0.0
  %950 = vmatprep.subr.mxu0 0.0
  %951 = vmatpush1.msra.mxu0 0.0
  %952 = vmatprep.subr.mxu0 0.0
  %953 = vmatpush1.msra.mxu0 %v917
  %954 = vmatprep.subr.mxu0 0.0
  %955 = vmatpush2.msra.mxu0 0.0
  %956 = vmatprep.subr.mxu0 0.0
  %957 = vmatpush2.msra.mxu0 0.0
  %958 = vmatprep.subr.mxu0 0.0
  %959 = vmatpush2.msra.mxu0 0.0
  %960 = vmatprep.subr.mxu0 0.0
  %961 = vmatpush2.msra.mxu0 0.0
  %962 = vmatprep.subr.mxu0 0.0
  %963 = vmatpush2.msra.mxu0 0.0
  %964 = vmatprep.subr.mxu0 0.0
  %965 = vmatpush2.msra.mxu0 0.0
  %966 = vmatprep.subr.mxu0 0.0
  %967 = vmatpush2.msra.mxu0 0.0
  %968 = vmatprep.subr.mxu0 0.0
  %969 = vmatpush2.msra.mxu0 0.0
  %970 = vmatprep.subr.mxu0 0.0
  %971 = vmatpush2.msra.mxu0 0.0
  %972 = vmatprep.subr.mxu0 0.0
  %973 = vmatpush2.msra.mxu0 0.0
  %974 = vmatprep.subr.mxu0 0.0
  %975 = vmatpush2.msra.mxu0 0.0
  %976 = vmatprep.subr.mxu0 0.0
  %977 = vmatpush2.msra.mxu0 0.0
  %978 = vmatprep.subr.mxu0 0.0
  %979 = vmatpush2.msra.mxu0 0.0
  %980 = vmatprep.subr.mxu0 0.0
  %981 = vmatpush2.msra.mxu0 0.0
  %982 = vmatprep.subr.mxu0 0.0
  %983 = vmatpush2.msra.mxu0 0.0
  %984 = vmatprep.subr.mxu0 0.0
  %985 = vmatpush2.msra.mxu0 0.0
  %986 = vmatprep.mubr.f32.mxu0 0.0
  %987 = vmatmul.mubr.f32.gmra.mxu0 %v920
  %v988 = vpop.f32.mrf.mxu0
  %v989 = vadd.f32 0.0, %v988
  %v990 = vpop.f32.mrf.mxu0
  %991 = vdwg.mxu0
  %992 = vset.pattern.permute.xlu0 7
  %993 = vperm.xlu0 %992, %v289
  %v994 = vpop.permute.xlu0 %993
  %v996 = vlaneseq
  %v997 = vshrl.u32 %v996, 7
  %v998 = vsub.s32 7, %v997
  %v999 = vrot.slane %v198, %v998
  %v1000 = vadd.f32 %v994, %v999
  %vm1001 = vcmp.gt.f32.partialorder %v1000, 0.0
  %v1002 = vmul.f32 %v1000, 0.2
  %v1003 = vsel %vm1001, %v1000, %v1002
  %v1004 = vadd.f32 %v1003, %v292
  %v1005 = vsel %vm307, %v1004, -inf
  %1006 = vmax.xlane.f32.xlu0 %v1005
  %v1007 = vpop.xlane.xlu0 %1006
  %v1008 = vsub.f32 %v1004, %v1007
  %v1009 = vmul.f32 %v1008, 1.442695
  %v1010 = vpow.pop %v1009
  %v1011 = vsel %vm307, %v1010, 0.0
  %1012 = vadd.xlane.f32.xlu0 %v1011
  %v1013 = vpop.xlane.xlu0 %1012
  %v1014 = vrcp.pop %v1013
  %v1015 = vmul.f32 %v1010, %v1014
  %1016 = vrot.lane.b32.xlu0 %v97, 72
  %v1017 = vpop.permute.xlu0 %1016
  %v1020 = vsel %vm307, %v1015, 0
  %1022 = vmatprep.subr.mxu0 0.0
  %1023 = vmatpush1.msra.mxu0 0.0
  %1024 = vmatprep.subr.mxu0 0.0
  %1025 = vmatpush1.msra.mxu0 0.0
  %1026 = vmatprep.subr.mxu0 0.0
  %1027 = vmatpush1.msra.mxu0 0.0
  %1028 = vmatprep.subr.mxu0 0.0
  %1029 = vmatpush1.msra.mxu0 0.0
  %1030 = vmatprep.subr.mxu0 0.0
  %1031 = vmatpush1.msra.mxu0 0.0
  %1032 = vmatprep.subr.mxu0 0.0
  %1033 = vmatpush1.msra.mxu0 0.0
  %1034 = vmatprep.subr.mxu0 0.0
  %1035 = vmatpush1.msra.mxu0 0.0
  %1036 = vmatprep.subr.mxu0 0.0
  %1037 = vmatpush1.msra.mxu0 0.0
  %1038 = vmatprep.subr.mxu0 0.0
  %1039 = vmatpush1.msra.mxu0 0.0
  %1040 = vmatprep.subr.mxu0 0.0
  %1041 = vmatpush1.msra.mxu0 0.0
  %1042 = vmatprep.subr.mxu0 0.0
  %1043 = vmatpush1.msra.mxu0 0.0
  %1044 = vmatprep.subr.mxu0 0.0
  %1045 = vmatpush1.msra.mxu0 0.0
  %1046 = vmatprep.subr.mxu0 0.0
  %1047 = vmatpush1.msra.mxu0 0.0
  %1048 = vmatprep.subr.mxu0 0.0
  %1049 = vmatpush1.msra.mxu0 0.0
  %1050 = vmatprep.subr.mxu0 0.0
  %1051 = vmatpush1.msra.mxu0 0.0
  %1052 = vmatprep.subr.mxu0 0.0
  %1053 = vmatpush1.msra.mxu0 %v1017
  %1054 = vmatprep.subr.mxu0 0.0
  %1055 = vmatpush2.msra.mxu0 0.0
  %1056 = vmatprep.subr.mxu0 0.0
  %1057 = vmatpush2.msra.mxu0 0.0
  %1058 = vmatprep.subr.mxu0 0.0
  %1059 = vmatpush2.msra.mxu0 0.0
  %1060 = vmatprep.subr.mxu0 0.0
  %1061 = vmatpush2.msra.mxu0 0.0
  %1062 = vmatprep.subr.mxu0 0.0
  %1063 = vmatpush2.msra.mxu0 0.0
  %1064 = vmatprep.subr.mxu0 0.0
  %1065 = vmatpush2.msra.mxu0 0.0
  %1066 = vmatprep.subr.mxu0 0.0
  %1067 = vmatpush2.msra.mxu0 0.0
  %1068 = vmatprep.subr.mxu0 0.0
  %1069 = vmatpush2.msra.mxu0 0.0
  %1070 = vmatprep.subr.mxu0 0.0
  %1071 = vmatpush2.msra.mxu0 0.0
  %1072 = vmatprep.subr.mxu0 0.0
  %1073 = vmatpush2.msra.mxu0 0.0
  %1074 = vmatprep.subr.mxu0 0.0
  %1075 = vmatpush2.msra.mxu0 0.0
  %1076 = vmatprep.subr.mxu0 0.0
  %1077 = vmatpush2.msra.mxu0 0.0
  %1078 = vmatprep.subr.mxu0 0.0
  %1079 = vmatpush2.msra.mxu0 0.0
  %1080 = vmatprep.subr.mxu0 0.0
  %1081 = vmatpush2.msra.mxu0 0.0
  %1082 = vmatprep.subr.mxu0 0.0
  %1083 = vmatpush2.msra.mxu0 0.0
  %1084 = vmatprep.subr.mxu0 0.0
  %1085 = vmatpush2.msra.mxu0 0.0
  %1086 = vmatprep.mubr.f32.mxu0 0.0
  %1087 = vmatmul.mubr.f32.gmra.mxu0 %v1020
  %v1088 = vpop.f32.mrf.mxu0
  %v1089 = vadd.f32 0.0, %v1088
  %v1090 = vpop.f32.mrf.mxu0
  %1091 = vdwg.mxu0
  %1093 = vrot.lane.b32.xlu0 %v489, 8
  %v1094 = vpop.permute.xlu0 %1093
  %1097 = vrot.lane.b32.xlu0 %v589, 16
  %v1098 = vpop.permute.xlu0 %1097
  %1101 = vrot.lane.b32.xlu0 %v689, 24
  %v1102 = vpop.permute.xlu0 %1101
  %1105 = vrot.lane.b32.xlu0 %v789, 32
  %v1106 = vpop.permute.xlu0 %1105
  %1109 = vrot.lane.b32.xlu0 %v889, 40
  %v1110 = vpop.permute.xlu0 %1109
  %1113 = vrot.lane.b32.xlu0 %v989, 48
  %v1114 = vpop.permute.xlu0 %1113
  %1117 = vrot.lane.b32.xlu0 %v1089, 56
  %v1118 = vpop.permute.xlu0 %1117
  %v1120 = vsel %vm307, %v389, %v1094
  %v1121 = vsel %vm26, %v1120, %v1098
  %vm1122 = vcmask 195584
  %v1123 = vsel %vm1122, %v1121, %v1102
  %vm1124 = vcmask 261120
  %v1125 = vsel %vm1124, %v1123, %v1106
  %vm1126 = vcmask 326656
  %v1127 = vsel %vm1126, %v1125, %v1110
  %vm1128 = vcmask 392192
  %v1129 = vsel %vm1128, %v1127, %v1114
  %vm1130 = vcmask 457728
  %v1131 = vsel %vm1130, %v1129, %v1118
  %v1132 = vld [vmem:[%s4] sm:$0x1]
  %v1134 = vlaneseq
  %v1135 = vshrl.u32 %v1134, 7
  %v1136 = vsub.s32 0, %v1135
  %v1137 = vrot.slane %v1132, %v1136
  %v1139 = vadd.f32 %v1131, %v1137
  %vm1140 = vcmp.gt.f32.partialorder %v1139, 0.0
  %v1141 = vmul.f32 %v1139, 1.442695
  %v1142 = vpow.pop %v1141
  %v1143 = vsub.f32 %v1142, 1.0
  %v1144 = vsel %vm1140, %v1139, %v1143
  %1145 = vst.msk [vmem:[%s6] sm:$0xff] %vm108, %v1144
  // Predicated region
  $region26: #{net_forward.2} parent=0 // pred_check
    _
  $region27: #{net_forward.2} parent=0 // pred_check_branch
    %1147 = sbr.rel (0) target = $region29
  $region28: #{net_forward.2} parent=0 // pred_region
    _
  $region29: #{net_forward.2} parent=0 // pred_fallthru
    _
  // Predicated region
  $region30: #{net_forward.2} parent=0 // pred_check
    _
  $region31: #{net_forward.2} parent=0 // pred_check_branch
    %1149 = sbr.rel (0) target = $region33
  $region32: #{net_forward.2} parent=0 // pred_region
    _
  $region33: #{net_forward.2} parent=0 // pred_fallthru
    _

</llo_original>
